<compile_context>
chip_gen: v6e
topology: v6e:2x2x1
jax: 0.10.0
libtpu: 0.0.40
codegen_flags: <defaults>
</compile_context>

<pallas_src>
import functools
import math

import jax
import jax.numpy as jnp
from jax.experimental import pallas as pl
from jax.experimental.pallas import tpu as pltpu


# ----------------------------------------------------------------------------
# Generation-specific tiling / VMEM budget
# ----------------------------------------------------------------------------
def _device_kind():
    try:
        return jax.devices()[0].device_kind.lower()
    except Exception:
        return ""


_KIND = _device_kind()
# 128-MiB-VMEM parts (v4/v5/v6) get a larger scoped-VMEM budget and larger M
# tiles; v7x (64 MiB physical per TensorCore) and unknown parts stay
# conservative.
_BIG_VMEM = any(tag in _KIND for tag in ("v4", "v5", "v6"))
VMEM_LIMIT = (96 if _BIG_VMEM else 48) * 1024 * 1024
TM_CAP = 512 if _BIG_VMEM else 256


def _cparams(sem):
    return pltpu.CompilerParams(dimension_semantics=sem,
                                vmem_limit_bytes=VMEM_LIMIT)


def _row_block(r):
    return 512 if r > 512 else r


# ----------------------------------------------------------------------------
# Tiled matmul kernel with fused epilogue (BN+PReLU / ReLU / GELU / +residual)
# ----------------------------------------------------------------------------
def _make_mm_kernel(mode, has_bn, has_res):
    def kernel(*refs):
        a_ref, b_ref = refs[0], refs[1]
        idx = 2
        if has_bn:
            s_ref, t_ref, al_ref = refs[idx], refs[idx + 1], refs[idx + 2]
            idx += 3
        if has_res:
            r_ref = refs[idx]
            idx += 1
        o_ref, acc_ref = refs[idx], refs[idx + 1]

        k = pl.program_id(2)

        @pl.when(k == 0)
        def _():
            acc_ref[...] = jnp.zeros_like(acc_ref)

        acc_ref[...] += jnp.dot(a_ref[...], b_ref[...],
                                preferred_element_type=jnp.float32)

        @pl.when(k == pl.num_programs(2) - 1)
        def _():
            y = acc_ref[...]
            if has_bn:                         # folded BatchNorm + PReLU
                y = y * s_ref[...] + t_ref[...]
                y = jnp.where(y >= 0.0, y, al_ref[...] * y)
            elif mode == "relu":
                y = jnp.maximum(y, 0.0)
            elif mode == "gelu":
                y = jax.nn.gelu(y)
            if has_res:                        # fused skip connection
                y = y + r_ref[...].astype(jnp.float32)
            o_ref[...] = y.astype(o_ref.dtype)

    return kernel


@functools.partial(jax.jit,
                   static_argnames=("mode", "has_bn", "has_res", "out_dtype"))
def _mm_call(a, b, s, t, al, res, *, mode, has_bn, has_res, out_dtype):
    M, K = a.shape
    N = b.shape[1]
    tm = min(M, TM_CAP)
    tk = 512 if (K > 512 and K % 512 == 0) else K   # full-K block otherwise
    tn = N                                          # N <= 640 in this model
    gm, gn, gk = pl.cdiv(M, tm), pl.cdiv(N, tn), K // tk

    in_specs = [pl.BlockSpec((tm, tk), lambda i, j, k: (i, k)),
                pl.BlockSpec((tk, tn), lambda i, j, k: (k, j))]
    args = [a, b]
    if has_bn:
        in_specs += [pl.BlockSpec((1, tn), lambda i, j, k: (0, j))] * 3
        args += [s, t, al]
    if has_res:
        in_specs += [pl.BlockSpec((tm, tn), lambda i, j, k: (i, j))]
        args += [res]

    return pl.pallas_call(
        _make_mm_kernel(mode, has_bn, has_res),
        out_shape=jax.ShapeDtypeStruct((M, N), out_dtype),
        grid_spec=pltpu.PrefetchScalarGridSpec(
            num_scalar_prefetch=0,
            grid=(gm, gn, gk),
            in_specs=in_specs,
            out_specs=pl.BlockSpec((tm, tn), lambda i, j, k: (i, j)),
            scratch_shapes=[pltpu.VMEM((tm, tn), jnp.float32)],
        ),
        compiler_params=_cparams(("parallel", "parallel", "arbitrary")),
    )(*args)


def matmul(a, b, scale=None, shift=None, alpha=None, residual=None,
           mode="none", out_dtype=jnp.float32):
    """(M,K)@(K,N) on the MXU in bf16 with f32 accumulation + fused epilogue."""
    return _mm_call(a.astype(jnp.bfloat16), b.astype(jnp.bfloat16),
                    scale, shift, alpha, residual,
                    mode=mode, has_bn=scale is not None,
                    has_res=residual is not None, out_dtype=out_dtype)


# ----------------------------------------------------------------------------
# VPU row-dot kernel for N=1 convolutions (head pred, RA final conv, CBAM
# spatial conv).  Fuses folded BN + PReLU and the "+ decoder" residual.
# ----------------------------------------------------------------------------
def _make_rowdot_kernel(has_bn, has_dec):
    def kernel(*refs):
        x_ref, w_ref = refs[0], refs[1]
        idx = 2
        if has_bn:
            s_ref, t_ref, a_ref = refs[idx], refs[idx + 1], refs[idx + 2]
            idx += 3
        if has_dec:
            d_ref = refs[idx]
            idx += 1
        o_ref = refs[idx]

        x = x_ref[...].astype(jnp.float32)               # (tm, K)
        w = w_ref[...].astype(jnp.float32)               # (1, K)
        y = jnp.sum(x * w, axis=-1, keepdims=True)       # lane reduce -> (tm, 1)
        if has_bn:
            y = y * s_ref[...] + t_ref[...]
            y = jnp.where(y >= 0.0, y, a_ref[...] * y)
        if has_dec:
            y = y + d_ref[...].astype(jnp.float32)
        o_ref[...] = y.astype(o_ref.dtype)

    return kernel


@functools.partial(jax.jit, static_argnames=("has_bn", "has_dec"))
def _rowdot_call(x, w, s, t, a, d, *, has_bn, has_dec):
    M, K = x.shape
    tm = min(M, 512)
    in_specs = [pl.BlockSpec((tm, K), lambda i: (i, 0)),
                pl.BlockSpec((1, K), lambda i: (0, 0))]
    args = [x, w]
    if has_bn:
        in_specs += [pl.BlockSpec((1, 1), lambda i: (0, 0))] * 3
        args += [s, t, a]
    if has_dec:
        in_specs += [pl.BlockSpec((tm, 1), lambda i: (i, 0))]
        args += [d]
    return pl.pallas_call(
        _make_rowdot_kernel(has_bn, has_dec),
        out_shape=jax.ShapeDtypeStruct((M, 1), jnp.float32),
        grid_spec=pltpu.PrefetchScalarGridSpec(
            num_scalar_prefetch=0, grid=(pl.cdiv(M, tm),),
            in_specs=in_specs,
            out_specs=pl.BlockSpec((tm, 1), lambda i: (i, 0)),
        ),
        compiler_params=_cparams(("parallel",)),
    )(*args)


def rowdot(x, w_row, bn=None, dec=None):
    s, t, a = bn if bn is not None else (None, None, None)
    return _rowdot_call(x.astype(jnp.bfloat16), w_row.astype(jnp.bfloat16),
                        s, t, a, dec,
                        has_bn=bn is not None, has_dec=dec is not None)


# ----------------------------------------------------------------------------
# Grouped / depthwise conv as a lane-dense VPU multiply-accumulate over taps.
# cols: (T, G, M) with M on lanes; weights (T, coutg, G, 1) broadcast on lanes.
# ----------------------------------------------------------------------------
def _gconv_kernel(c_ref, w_ref, s_ref, t_ref, a_ref, o_ref):
    T = c_ref.shape[0]
    coutg = w_ref.shape[1]
    for co in range(coutg):
        acc = c_ref[0].astype(jnp.float32) * w_ref[0, co]        # (G, tm)
        for tt in range(1, T):
            acc = acc + c_ref[tt].astype(jnp.float32) * w_ref[tt, co]
        y = acc * s_ref[co] + t_ref[co]                          # folded BN
        y = jnp.where(y >= 0.0, y, a_ref[co] * y)                # PReLU
        o_ref[co] = y.astype(o_ref.dtype)


@jax.jit
def _gconv_call(cols, wg, sg, tg, ag):
    T, G, M = cols.shape
    coutg = wg.shape[1]
    tm = M if M <= 2048 else 2048
    return pl.pallas_call(
        _gconv_kernel,
        out_shape=jax.ShapeDtypeStruct((coutg, G, M), jnp.bfloat16),
        grid_spec=pltpu.PrefetchScalarGridSpec(
            num_scalar_prefetch=0,
            grid=(pl.cdiv(M, tm),),
            in_specs=[
                pl.BlockSpec((T, G, tm), lambda i: (0, 0, i)),
                pl.BlockSpec((T, coutg, G, 1), lambda i: (0, 0, 0, 0)),
                pl.BlockSpec((coutg, G, 1), lambda i: (0, 0, 0)),
                pl.BlockSpec((coutg, G, 1), lambda i: (0, 0, 0)),
                pl.BlockSpec((coutg, G, 1), lambda i: (0, 0, 0)),
            ],
            out_specs=pl.BlockSpec((coutg, G, tm), lambda i: (0, 0, i)),
        ),
        compiler_params=_cparams(("parallel",)),
    )(cols, wg, sg, tg, ag)


def grouped_conv_forward(x, p):
    """3x3 dilated grouped conv (stride 1, pad = dilation) + fused BN/PReLU."""
    B, H, W, Cin = x.shape
    G, cin_g, cout_g, d = p["groups"], p["cin_g"], p["cout_g"], p["dil"]
    M = B * H * W
    # channel-major layout so the tap slabs are already (G, M)
    xcm = jnp.transpose(x, (3, 0, 1, 2)).reshape(G, cin_g, B, H, W)
    xp = jnp.pad(xcm, ((0, 0), (0, 0), (0, 0), (d, d), (d, d)))
    slabs = []
    for i in range(p["k"]):
        for j in range(p["k"]):
            for ci in range(cin_g):
                slabs.append(
                    xp[:, ci, :, i * d:i * d + H, j * d:j * d + W].reshape(G, M))
    cols = jnp.stack(slabs, axis=0).astype(jnp.bfloat16)        # (T, G, M)
    y = _gconv_call(cols, p["wg"], p["sg"], p["tg"], p["ag"])   # (coutg, G, M)
    # back to grouped-conv channel order (g-major, co-minor) in NHWC
    return jnp.transpose(y, (2, 1, 0)).reshape(B, H, W, G * cout_g)


# ----------------------------------------------------------------------------
# Elementwise / fusion kernels
# ----------------------------------------------------------------------------
def _sigmoid_kernel(x_ref, o_ref):
    o_ref[...] = jax.nn.sigmoid(x_ref[...].astype(jnp.float32))


@jax.jit
def _sigmoid_call(x):
    R, C = x.shape
    tr = _row_block(R)
    return pl.pallas_call(
        _sigmoid_kernel,
        out_shape=jax.ShapeDtypeStruct((R, C), jnp.float32),
        grid_spec=pltpu.PrefetchScalarGridSpec(
            num_scalar_prefetch=0, grid=(pl.cdiv(R, tr),),
            in_specs=[pl.BlockSpec((tr, C), lambda i: (i, 0))],
            out_specs=pl.BlockSpec((tr, C), lambda i: (i, 0)),
        ),
        compiler_params=_cparams(("parallel",)),
    )(x)


def _affine_prelu_kernel(x_ref, s_ref, t_ref, a_ref, o_ref):
    y = x_ref[...].astype(jnp.float32) * s_ref[...] + t_ref[...]
    o_ref[...] = jnp.where(y >= 0.0, y, a_ref[...] * y).astype(o_ref.dtype)


@jax.jit
def _affine_prelu_call(x, s, t, a):
    R, C = x.shape
    tr = _row_block(R)
    return pl.pallas_call(
        _affine_prelu_kernel,
        out_shape=jax.ShapeDtypeStruct((R, C), jnp.bfloat16),
        grid_spec=pltpu.PrefetchScalarGridSpec(
            num_scalar_prefetch=0, grid=(pl.cdiv(R, tr),),
            in_specs=[pl.BlockSpec((tr, C), lambda i: (i, 0)),
                      pl.BlockSpec((1, C), lambda i: (0, 0)),
                      pl.BlockSpec((1, C), lambda i: (0, 0)),
                      pl.BlockSpec((1, C), lambda i: (0, 0))],
            out_specs=pl.BlockSpec((tr, C), lambda i: (i, 0)),
        ),
        compiler_params=_cparams(("parallel",)),
    )(x, s, t, a)


def _cfp_fuse_kernel(b1_ref, b2_ref, b3_ref, b4_ref, s_ref, t_ref, al_ref, o_ref):
    a1 = b1_ref[...].astype(jnp.float32)
    a2 = a1 + b2_ref[...].astype(jnp.float32)
    a3 = a2 + b3_ref[...].astype(jnp.float32)
    a4 = a3 + b4_ref[...].astype(jnp.float32)
    y = jnp.concatenate([a1, a2, a3, a4], axis=-1)
    y = y * s_ref[...] + t_ref[...]
    y = jnp.where(y >= 0.0, y, al_ref[...] * y)
    o_ref[...] = y.astype(o_ref.dtype)


@jax.jit
def _cfp_fuse_call(b1, b2, b3, b4, s, t, al):
    R, Cq = b1.shape
    C = 4 * Cq
    tr = _row_block(R)
    return pl.pallas_call(
        _cfp_fuse_kernel,
        out_shape=jax.ShapeDtypeStruct((R, C), jnp.bfloat16),
        grid_spec=pltpu.PrefetchScalarGridSpec(
            num_scalar_prefetch=0, grid=(pl.cdiv(R, tr),),
            in_specs=[pl.BlockSpec((tr, Cq), lambda i: (i, 0))] * 4
                     + [pl.BlockSpec((1, C), lambda i: (0, 0))] * 3,
            out_specs=pl.BlockSpec((tr, C), lambda i: (i, 0)),
        ),
        compiler_params=_cparams(("parallel",)),
    )(b1, b2, b3, b4, s, t, al)


def _bmod_kernel(x_ref, s_ref, o_ref, *, rev):
    sig = jax.nn.sigmoid(s_ref[0].astype(jnp.float32))          # (thw, 1)
    f = (1.0 - sig) if rev else sig
    o_ref[0] = (x_ref[0].astype(jnp.float32) * f).astype(o_ref.dtype)


@functools.partial(jax.jit, static_argnames=("rev",))
def _bmod_call(x, s, *, rev):
    B, HW, C = x.shape
    thw = HW if HW <= 2048 else 2048
    return pl.pallas_call(
        functools.partial(_bmod_kernel, rev=rev),
        out_shape=jax.ShapeDtypeStruct((B, HW, C), jnp.bfloat16),
        grid_spec=pltpu.PrefetchScalarGridSpec(
            num_scalar_prefetch=0, grid=(B, pl.cdiv(HW, thw)),
            in_specs=[pl.BlockSpec((1, thw, C), lambda b, h: (b, h, 0)),
                      pl.BlockSpec((1, thw, 1), lambda b, h: (b, h, 0))],
            out_specs=pl.BlockSpec((1, thw, C), lambda b, h: (b, h, 0)),
        ),
        compiler_params=_cparams(("parallel", "parallel")),
    )(x, s)


# CBAM: spatial mean/max pooling over HW (lane-dense (B,1,C) outputs)
def _spool_kernel(x_ref, mean_ref, max_ref):
    x = x_ref[0].astype(jnp.float32)
    mean_ref[0] = jnp.mean(x, axis=0, keepdims=True)
    max_ref[0] = jnp.max(x, axis=0, keepdims=True)


@jax.jit
def _spool_call(x):
    # TODO(synk): single-block reduction per batch item; on v7x with B==1 only
    # one TensorCore is used for this (small) kernel.
    B, HW, C = x.shape
    return pl.pallas_call(
        _spool_kernel,
        out_shape=(jax.ShapeDtypeStruct((B, 1, C), jnp.float32),
                   jax.ShapeDtypeStruct((B, 1, C), jnp.float32)),
        grid_spec=pltpu.PrefetchScalarGridSpec(
            num_scalar_prefetch=0, grid=(B,),
            in_specs=[pl.BlockSpec((1, HW, C), lambda b: (b, 0, 0))],
            out_specs=(pl.BlockSpec((1, 1, C), lambda b: (b, 0, 0)),
                       pl.BlockSpec((1, 1, C), lambda b: (b, 0, 0))),
        ),
        compiler_params=_cparams(("parallel",)),
    )(x)


# CBAM: channel-attention apply (in-kernel broadcast) + channel mean/max pool
def _camix_kernel(x_ref, m1_ref, m2_ref, xs_ref, pool_ref):
    ca = jax.nn.sigmoid(m1_ref[0].astype(jnp.float32)
                        + m2_ref[0].astype(jnp.float32))         # (1, C)
    xs = x_ref[0].astype(jnp.float32) * ca                       # (thw, C)
    xs_ref[0] = xs.astype(xs_ref.dtype)
    mn = jnp.mean(xs, axis=-1, keepdims=True)
    mx = jnp.max(xs, axis=-1, keepdims=True)
    pool_ref[0] = jnp.concatenate([mn, mx], axis=-1).astype(pool_ref.dtype)


@jax.jit
def _camix_call(x, m1, m2):
    B, HW, C = x.shape
    thw = HW if HW <= 2048 else 2048
    return pl.pallas_call(
        _camix_kernel,
        out_shape=(jax.ShapeDtypeStruct((B, HW, C), jnp.bfloat16),
                   jax.ShapeDtypeStruct((B, HW, 2), jnp.bfloat16)),
        grid_spec=pltpu.PrefetchScalarGridSpec(
            num_scalar_prefetch=0, grid=(B, pl.cdiv(HW, thw)),
            in_specs=[pl.BlockSpec((1, thw, C), lambda b, h: (b, h, 0)),
                      pl.BlockSpec((1, 1, C), lambda b, h: (b, 0, 0)),
                      pl.BlockSpec((1, 1, C), lambda b, h: (b, 0, 0))],
            out_specs=(pl.BlockSpec((1, thw, C), lambda b, h: (b, h, 0)),
                       pl.BlockSpec((1, thw, 2), lambda b, h: (b, h, 0))),
        ),
        compiler_params=_cparams(("parallel", "parallel")),
    )(x, m1, m2)


# ----------------------------------------------------------------------------
# Axial self-attention (one pallas_call gridded over the batch, optional fused
# external residual).
# ----------------------------------------------------------------------------
def _make_attn_kernel(has_res):
    def kernel(*refs):
        g_ref, q_ref, kt_ref, v_ref, x_ref = refs[:5]
        idx = 5
        if has_res:
            r_ref = refs[idx]
            idx += 1
        o_ref = refs[idx]

        q = q_ref[0].astype(jnp.float32)       # (N1, axis)
        kt = kt_ref[0].astype(jnp.float32)     # (axis, N1)
        v = v_ref[0].astype(jnp.float32)       # (N2, axis)
        # amT[j, a] = sum_n k[n, j] * q[n, a]  (transposed attention logits)
        amt = jnp.dot(kt, q, preferred_element_type=jnp.float32)   # (axis, axis)
        m = jnp.max(amt, axis=0, keepdims=True)
        e = jnp.exp(amt - m)
        attn_t = e * pl.reciprocal(jnp.sum(e, axis=0, keepdims=True), approx=True)
        out = jnp.dot(v, attn_t, preferred_element_type=jnp.float32)  # (N2, axis)
        y = g_ref[0, 0] * out + x_ref[0].astype(jnp.float32)
        if has_res:
            y = y + r_ref[0].astype(jnp.float32)
        o_ref[0] = y.astype(o_ref.dtype)

    return kernel


@functools.partial(jax.jit, static_argnames=("has_res",))
def _attn_call(gamma, q, kt, v, xv, res, *, has_res):
    # TODO(synk): attention is still one grid step per batch item; stacking the
    # h/w passes and batch on the sublane axis would improve occupancy further.
    B, N1, axis = q.shape
    N2 = v.shape[1]
    in_specs = [pl.BlockSpec((1, 1), lambda b: (0, 0)),
                pl.BlockSpec((1, N1, axis), lambda b: (b, 0, 0)),
                pl.BlockSpec((1, axis, N1), lambda b: (b, 0, 0)),
                pl.BlockSpec((1, N2, axis), lambda b: (b, 0, 0)),
                pl.BlockSpec((1, N2, axis), lambda b: (b, 0, 0))]
    args = [gamma, q, kt, v, xv]
    if has_res:
        in_specs.append(pl.BlockSpec((1, N2, axis), lambda b: (b, 0, 0)))
        args.append(res)
    return pl.pallas_call(
        _make_attn_kernel(has_res),
        out_shape=jax.ShapeDtypeStruct((B, N2, axis), jnp.bfloat16),
        grid_spec=pltpu.PrefetchScalarGridSpec(
            num_scalar_prefetch=0, grid=(B,),
            in_specs=in_specs,
            out_specs=pl.BlockSpec((1, N2, axis), lambda b: (b, 0, 0)),
        ),
        compiler_params=_cparams(("parallel",)),
    )(*args)


# ----------------------------------------------------------------------------
# JAX glue: im2col, bilinear resize
# ----------------------------------------------------------------------------
def im2col(x, kh, kw, stride, padding, dilation):
    # TODO(synk): still materializes the kh*kw-expanded patches in HBM (bf16);
    # folding the tap loop into the matmul K grid axis would remove this.
    x = x.astype(jnp.bfloat16)
    B, H, W, C = x.shape
    sh, sw = stride
    ph, pw = padding
    dh, dw = dilation
    xp = jnp.pad(x, ((0, 0), (ph, ph), (pw, pw), (0, 0)))
    Hp, Wp = H + 2 * ph, W + 2 * pw
    Ho = (Hp - (dh * (kh - 1) + 1)) // sh + 1
    Wo = (Wp - (dw * (kw - 1) + 1)) // sw + 1
    cols = []
    for i in range(kh):
        for j in range(kw):
            r0, c0 = i * dh, j * dw
            patch = xp[:, r0:r0 + (Ho - 1) * sh + 1:sh,
                       c0:c0 + (Wo - 1) * sw + 1:sw, :]
            cols.append(patch)
    col = jnp.concatenate(cols, axis=-1)          # K index = (i*kw + j)*C + c
    return col.reshape(B * Ho * Wo, kh * kw * C), (B, Ho, Wo)


def resize_bilinear(x, oh, ow):
    """F.interpolate(mode='bilinear', align_corners=False) semantics, NHWC."""
    B, H, W, C = x.shape
    if (H, W) == (oh, ow):
        return x

    def src(o_size, i_size):
        scale = i_size / o_size
        s = (jnp.arange(o_size, dtype=jnp.float32) + 0.5) * scale - 0.5
        s = jnp.maximum(s, 0.0)
        i0 = jnp.minimum(jnp.floor(s).astype(jnp.int32), i_size - 1)
        i1 = jnp.minimum(i0 + 1, i_size - 1)
        w = s - i0.astype(jnp.float32)
        return i0, i1, w

    y0, y1, wy = src(oh, H)
    ix0, ix1, wx = src(ow, W)
    top = x[:, y0, :, :]
    bot = x[:, y1, :, :]
    rows = top * (1.0 - wy)[None, :, None, None] + bot * wy[None, :, None, None]
    left = rows[:, :, ix0, :]
    right = rows[:, :, ix1, :]
    return left * (1.0 - wx)[None, None, :, None] + right * wx[None, None, :, None]


# ----------------------------------------------------------------------------
# Parameter construction (deterministic, synthetic)
# ----------------------------------------------------------------------------
class ParamGen:
    def __init__(self, seed=0):
        self._key = jax.random.PRNGKey(seed)

    def normal(self, shape, scale):
        self._key, sub = jax.random.split(self._key)
        return scale * jax.random.normal(sub, shape, jnp.float32)


def make_bn_vectors(pg, c):
    return {"s": 1.0 + pg.normal((1, c), 0.05),
            "t": pg.normal((1, c), 0.05),
            "a": jnp.full((1, c), 0.25, jnp.float32)}


def make_conv_params(pg, cin, cout, k, stride=1, padding=0, dilation=1,
                     bn_acti=False):
    fan_in = k * k * cin
    p = {
        "w": pg.normal((k * k * cin, cout), 1.0 / math.sqrt(fan_in)).astype(jnp.bfloat16),
        "k": (k, k), "stride": (stride, stride), "pad": (padding, padding),
        "dil": (dilation, dilation), "bn_acti": bn_acti,
    }
    if bn_acti:
        p["bn_scale"] = 1.0 + pg.normal((1, cout), 0.05)
        p["bn_shift"] = pg.normal((1, cout), 0.05)
        p["alpha"] = jnp.full((1, cout), 0.25, jnp.float32)
    return p


def make_grouped_conv_params(pg, cin, cout, k, dilation, groups):
    G = groups
    cin_g = cin // G
    cout_g = cout // G
    T = k * k * cin_g
    fan_in = T
    return {
        "wg": pg.normal((T, cout_g, G, 1), 1.0 / math.sqrt(fan_in)),
        "sg": 1.0 + pg.normal((cout_g, G, 1), 0.05),
        "tg": pg.normal((cout_g, G, 1), 0.05),
        "ag": jnp.full((cout_g, G, 1), 0.25, jnp.float32),
        "dil": dilation, "groups": G, "cin_g": cin_g, "cout_g": cout_g, "k": k,
    }


def make_cfp_params(pg, n, d=8):
    dils = [1, d // 4 + 1, d // 2 + 1, d + 1]
    G = n // 16
    p = {
        "bn1": make_bn_vectors(pg, n),
        "conv1x1_1": make_conv_params(pg, n, n // 4, 3, padding=1, bn_acti=True),
        "bn2": make_bn_vectors(pg, n),
        "conv1x1": make_conv_params(pg, n, n, 1, padding=0, bn_acti=False),
        "branches": [],
    }
    for dd in dils:
        p["branches"].append([
            make_grouped_conv_params(pg, n // 4, n // 16, 3, dd, G),
            make_grouped_conv_params(pg, n // 16, n // 16, 3, dd, G),
            make_grouped_conv_params(pg, n // 16, n // 8, 3, dd, G),
        ])
    return p


def make_cbam_params(pg, c, ratio=16, ksize=7):
    hid = max(c // ratio, 1)
    return {
        "fc1": pg.normal((c, hid), 1.0 / math.sqrt(c)).astype(jnp.bfloat16),
        "fc2": pg.normal((hid, c), 1.0 / math.sqrt(hid)).astype(jnp.bfloat16),
        "spatial": make_conv_params(pg, 2, 1, ksize, padding=ksize // 2),
    }


def make_self_attn_params(pg, c):
    c8 = c // 8
    return {
        # fused Q/K/V 1x1 weights: columns [q | k | v]
        "wqkv": pg.normal((c, 2 * c8 + c), 1.0 / math.sqrt(c)).astype(jnp.bfloat16),
        # Original init is torch.zeros(1); a small nonzero value is used so the
        # attention path actually contributes with synthetic weights.
        "gamma": jnp.full((1, 1), 0.1, jnp.float32),
    }


def make_aa_params(pg, cin, cout):
    return {
        "conv0": make_conv_params(pg, cin, cout, 1),
        "conv1": make_conv_params(pg, cout, cout, 3, padding=1),
        "hattn": make_self_attn_params(pg, cout),
        "wattn": make_self_attn_params(pg, cout),
    }


def make_backbone_params(pg, in_ch=3, chans=(64, 128, 320, 512), patches=(4, 2, 2, 2)):
    ws = []
    c = in_ch
    for ps, co in zip(patches, chans):
        fan = ps * ps * c
        ws.append(pg.normal((fan, co), 1.0 / math.sqrt(fan)).astype(jnp.bfloat16))
        c = co
    return {"w": ws, "patches": patches}


def make_head_params(pg, in_chs=(64, 128, 320, 512), embed=64, num_classes=1):
    return {
        "proj": [pg.normal((c, embed), 1.0 / math.sqrt(c)).astype(jnp.bfloat16)
                 for c in in_chs],
        "fuse": pg.normal((embed * len(in_chs), embed),
                          1.0 / math.sqrt(embed * len(in_chs))).astype(jnp.bfloat16),
        "pred": pg.normal((embed, num_classes), 1.0 / math.sqrt(embed)).astype(jnp.bfloat16),
    }


def build_params(seed=0, in_channels=(64, 128, 320, 512)):
    pg = ParamGen(seed)
    return {
        "backbone": make_backbone_params(pg),
        "head": make_head_params(pg, in_channels),
        "cbam": [make_cbam_params(pg, c) for c in in_channels],
        "cfp": [make_cfp_params(pg, c, 8) for c in in_channels],
        "aa": [make_aa_params(pg, c, c) for c in in_channels],
        "ra": [[make_conv_params(pg, c, 32, 3, padding=1, bn_acti=True),
                make_conv_params(pg, 32, 32, 3, padding=1, bn_acti=True),
                make_conv_params(pg, 32, 1, 3, padding=1, bn_acti=True)]
               for c in in_channels],
    }


# ----------------------------------------------------------------------------
# Module forward functions
# ----------------------------------------------------------------------------
def conv_forward(x, p, dec=None, out_dtype=jnp.bfloat16):
    kh, kw = p["k"]
    cout = p["w"].shape[1]
    if kh == 1 and kw == 1 and p["stride"] == (1, 1) and p["pad"] == (0, 0):
        B, H, W, C = x.shape
        col, dims = x.reshape(B * H * W, C), (B, H, W)
    else:
        col, dims = im2col(x, kh, kw, p["stride"], p["pad"], p["dil"])
    B, Ho, Wo = dims
    if cout == 1:
        # N=1 convolutions go to the VPU row-dot kernel (fused BN/PReLU + dec)
        bn = ((p["bn_scale"], p["bn_shift"], p["alpha"])
              if p["bn_acti"] else None)
        y = rowdot(col, p["w"].reshape(1, -1), bn=bn, dec=dec)
        return y.reshape(B, Ho, Wo, 1)
    if p["bn_acti"]:
        y = matmul(col, p["w"], p["bn_scale"], p["bn_shift"], p["alpha"],
                   mode="affine_prelu", out_dtype=out_dtype)
    else:
        y = matmul(col, p["w"], mode="none", out_dtype=out_dtype)
    return y.reshape(B, Ho, Wo, -1)


def backbone_forward(x, p):
    # TODO(synk): real backbone is an mmseg-config PVTv2; this stand-in only matches
    # the output contract (strides 4/8/16/32, channels 64/128/320/512).
    feats = []
    cur = x
    for w, ps in zip(p["w"], p["patches"]):
        B, H, W, C = cur.shape
        cur = cur.reshape(B, H // ps, ps, W // ps, ps, C)
        cur = jnp.transpose(cur, (0, 1, 3, 2, 4, 5)).reshape(
            B, H // ps, W // ps, ps * ps * C)
        Bo, Ho, Wo, K = cur.shape
        cur = matmul(cur.reshape(Bo * Ho * Wo, K), w, mode="gelu",
                     out_dtype=jnp.bfloat16).reshape(Bo, Ho, Wo, -1)
        feats.append(cur)
    return feats


def head_forward(feats, p):
    # TODO(synk): real decode_head comes from an mmseg config; SegFormer-style
    # all-MLP stand-in (num_classes=1, align_corners=False) with same I/O contract.
    B, H1, W1, _ = feats[0].shape
    outs = []
    for f, w in zip(feats, p["proj"]):
        Bf, Hf, Wf, Cf = f.shape
        y = matmul(f.reshape(-1, Cf), w, mode="none",
                   out_dtype=jnp.bfloat16).reshape(Bf, Hf, Wf, -1)
        outs.append(resize_bilinear(y, H1, W1).astype(jnp.bfloat16))
    cat = jnp.concatenate(outs, axis=-1)
    fused = matmul(cat.reshape(-1, cat.shape[-1]), p["fuse"], mode="relu",
                   out_dtype=jnp.bfloat16)
    pred = rowdot(fused, p["pred"].reshape(1, -1))           # (R, 1) f32
    return pred.reshape(B, H1, W1, 1)


def cbam_forward(x, p):
    B, H, W, C = x.shape
    HW = H * W
    x3 = x.reshape(B, HW, C)
    avg, mx = _spool_call(x3)                        # (B,1,C) each

    def mlp(v):                                      # shared MLP, ReLU fused
        h = matmul(v, p["fc1"], mode="relu", out_dtype=jnp.bfloat16)
        return matmul(h, p["fc2"], mode="none")

    m_avg = mlp(avg.reshape(B, C)).reshape(B, 1, C)
    m_max = mlp(mx.reshape(B, C)).reshape(B, 1, C)
    # channel attention apply + channel mean/max pooling in one kernel
    xs, pooled = _camix_call(x3, m_avg, m_max)       # (B,HW,C), (B,HW,2)
    sa = conv_forward(pooled.reshape(B, H, W, 2), p["spatial"])   # (B,H,W,1)
    out = _bmod_call(xs, sa.reshape(B, HW, 1), rev=False)         # x * sigmoid(sa)
    return out.reshape(B, H, W, C)


def cfp_forward(x, p):
    B, H, W, C = x.shape
    R = B * H * W
    x2 = x.reshape(R, C)
    inp = _affine_prelu_call(x2, p["bn1"]["s"], p["bn1"]["t"],
                             p["bn1"]["a"]).reshape(B, H, W, C)
    inp = conv_forward(inp, p["conv1x1_1"])
    bouts = []
    for br in p["branches"]:
        o1 = grouped_conv_forward(inp, br[0])
        o2 = grouped_conv_forward(o1, br[1])
        o3 = grouped_conv_forward(o2, br[2])
        bouts.append(jnp.concatenate([o1, o2, o3], axis=-1).reshape(R, C // 4))
    # prefix-sum over branches + concat + BN/PReLU fused in one kernel
    fused = _cfp_fuse_call(bouts[0], bouts[1], bouts[2], bouts[3],
                           p["bn2"]["s"], p["bn2"]["t"], p["bn2"]["a"])
    # 1x1 conv with the skip connection fused into the matmul epilogue
    out = matmul(fused, p["conv1x1"]["w"], residual=x2, mode="none",
                 out_dtype=jnp.bfloat16)
    return out.reshape(B, H, W, C)


def self_attn_forward(x, p, mode, residual=None):
    # NOTE: replicates the PyTorch reference exactly, including the raw
    # .view(B, -1, axis) on contiguous NCHW (which interleaves the non-axis dims).
    B, H, W, C = x.shape
    C8 = C // 8
    axis = H if mode == "h" else W
    qkv = matmul(x.reshape(B * H * W, C), p["wqkv"], mode="none",
                 out_dtype=jnp.bfloat16)
    q = qkv[:, :C8].reshape(B, H, W, C8)
    k = qkv[:, C8:2 * C8].reshape(B, H, W, C8)
    v = qkv[:, 2 * C8:].reshape(B, H, W, C)

    def to_view(t):   # torch .view on contiguous NCHW
        return jnp.transpose(t, (0, 3, 1, 2)).reshape(B, -1, axis)

    qv, kv, vv, xv = to_view(q), to_view(k), to_view(v), to_view(x)
    kt = jnp.transpose(kv, (0, 2, 1))                 # (B, axis, N1)
    res = to_view(residual) if residual is not None else None
    out = _attn_call(p["gamma"], qv, kt, vv, xv, res,
                     has_res=residual is not None)    # (B, N2, axis)
    return jnp.transpose(out.reshape(B, C, H, W), (0, 2, 3, 1))


def aa_forward(x, p, residual=None):
    x = conv_forward(x, p["conv0"])
    x = conv_forward(x, p["conv1"])
    hx = self_attn_forward(x, p["hattn"], "h")
    # the external residual (aa += cfp_out) is fused into the second pass
    return self_attn_forward(hx, p["wattn"], "w", residual=residual)


# ----------------------------------------------------------------------------
# LesionSegmentation forward
# ----------------------------------------------------------------------------
def lesion_segmentation_forward(params, x_nchw):
    x = jnp.transpose(x_nchw, (0, 2, 3, 1)).astype(jnp.float32)  # NCHW -> NHWC
    B, H, W, _ = x.shape

    x1, x2, x3, x4 = backbone_forward(x, params["backbone"])
    sizes = [f.shape[1:3] for f in (x1, x2, x3, x4)]

    xc = [cbam_forward(f, p) for f, p in zip((x1, x2, x3, x4), params["cbam"])]
    decoder_1 = head_forward(xc, params["head"])           # (B, H/4, W/4, 1)
    lateral_map_1 = resize_bilinear(decoder_1, H, W)

    laterals = [lateral_map_1]
    feats = [x4, x3, x2, x1]
    idxs = [3, 2, 1, 0]
    decoder_prev = decoder_1
    for stage in range(4):
        i = idxs[stage]
        h_i, w_i = sizes[i]
        Ci = feats[stage].shape[-1]
        R = B * h_i * w_i
        dec = resize_bilinear(decoder_prev, h_i, w_i)                 # (B,h,w,1)
        cfp_out = cfp_forward(feats[stage], params["cfp"][i])
        # aa = AA(cfp_out) + cfp_out   (residual fused inside the attention)
        aa = aa_forward(cfp_out, params["aa"][i], residual=cfp_out)
        # reverse attention: (1 - sigmoid(dec)) broadcast over channels in-kernel
        aa_o = _bmod_call(aa.reshape(B, h_i * w_i, Ci),
                          dec.reshape(B, h_i * w_i, 1), rev=True)
        ra = aa_o.reshape(B, h_i, w_i, Ci)
        ra = conv_forward(ra, params["ra"][i][0])
        ra = conv_forward(ra, params["ra"][i][1])
        # last RA conv (32 -> 1): VPU row-dot with BN/PReLU and +dec fused
        x_r = conv_forward(ra, params["ra"][i][2], dec=dec.reshape(R, 1))
        laterals.append(resize_bilinear(x_r, H, W))
        decoder_prev = x_r

    # single lane-dense batched sigmoid over all five full-resolution maps
    stacked = jnp.stack([m[..., 0] for m in laterals], axis=0)   # (5, B, H, W)
    sg = _sigmoid_call(stacked.reshape(5 * B, H * W)).reshape(5, B, H, W)
    outs = [sg[i][:, None, :, :] for i in range(5)]              # NCHW (B,1,H,W)
    # torch return order: (map5, map4, map3, map2, map1)
    return tuple(outs[::-1])


# ----------------------------------------------------------------------------
if __name__ == "__main__":
    key = jax.random.PRNGKey(0)
    x = jax.random.normal(key, (2, 3, 64, 64), jnp.float32)  # NCHW, PyTorch layout
    params = build_params(seed=0)

    outs = lesion_segmentation_forward(params, x)
    outs = jax.block_until_ready(outs)

    assert len(outs) == 5
    for o in outs:
        assert o.shape == (2, 1, 64, 64), o.shape
        assert bool(jnp.all(jnp.isfinite(o)))
        assert bool(jnp.all((o >= 0.0) & (o <= 1.0)))  # sigmoid outputs
    print("KERNEL_OK")
</pallas_src>

<mosaic_0001>
module attributes {stable_mosaic.version = 11 : i64} {
  func.func @kernel(%arg0: i32, %arg1: i32, %arg2: i32, %arg3: memref<256x48xbf16, #tpu.memory_space<vmem>>, %arg4: memref<48x64xbf16, #tpu.memory_space<vmem>>, %arg5: memref<256x64xbf16, #tpu.memory_space<vmem>>, %arg6: memref<256x64xf32, #tpu.memory_space<vmem>>) attributes {dimension_semantics = [#tpu.dimension_semantics<parallel>, #tpu.dimension_semantics<parallel>, #tpu.dimension_semantics<arbitrary>], iteration_bounds = array<i64: 2, 1, 1>, scalar_prefetch = 0 : i64, scratch_operands = 1 : i64, tpu.core_type = #tpu.core_type<tc>, window_params = [{transform_indices = @transform_0, window_bounds = array<i64: 256, 48>}, {transform_indices = @transform_1, window_bounds = array<i64: 48, 64>}, {transform_indices = @transform_2, window_bounds = array<i64: 256, 64>}]} {
    %c0_i32 = arith.constant 0 : i32
    %0 = arith.cmpi eq, %arg2, %c0_i32 : i32
    %1 = arith.extui %0 : i1 to i32
    %c0_i32_0 = arith.constant 0 : i32
    %2 = arith.cmpi ne, %1, %c0_i32_0 : i32
    scf.if %2 {
      %cst_10 = arith.constant 0.000000e+00 : f32
      %12 = vector.broadcast %cst_10 : f32 to vector<256x64xf32>
      %c0_11 = arith.constant 0 : index
      %c0_12 = arith.constant 0 : index
      %13 = vector.load %arg6[%c0_11, %c0_12] : memref<256x64xf32, #tpu.memory_space<vmem>>, vector<256x64xf32>
      tpu.vector_store %arg6[%c0_11, %c0_12], %12 {strides = array<i32>} : memref<256x64xf32, #tpu.memory_space<vmem>>, vector<256x64xf32>,
    } else {
    }
    %c0 = arith.constant 0 : index
    %c0_1 = arith.constant 0 : index
    %3 = vector.load %arg6[%c0, %c0_1] : memref<256x64xf32, #tpu.memory_space<vmem>>, vector<256x64xf32>
    %c0_2 = arith.constant 0 : index
    %c0_3 = arith.constant 0 : index
    %4 = vector.load %arg3[%c0_2, %c0_3] : memref<256x48xbf16, #tpu.memory_space<vmem>>, vector<256x48xbf16>
    %c0_4 = arith.constant 0 : index
    %c0_5 = arith.constant 0 : index
    %5 = vector.load %arg4[%c0_4, %c0_5] : memref<48x64xbf16, #tpu.memory_space<vmem>>, vector<48x64xbf16>
    %cst = arith.constant dense<0.000000e+00> : vector<256x64xf32>
    %6 = tpu.matmul %4, %5, %cst {dimension_numbers = #tpu.dot_dimension_numbers<[1], [0], [0], [1], [0, 0, 1, 1], [], []>} : vector<256x48xbf16>, vector<48x64xbf16>, vector<256x64xf32> -> vector<256x64xf32>
    %7 = arith.addf %3, %6 : vector<256x64xf32>
    %c0_6 = arith.constant 0 : index
    %c0_7 = arith.constant 0 : index
    %8 = vector.load %arg6[%c0_6, %c0_7] : memref<256x64xf32, #tpu.memory_space<vmem>>, vector<256x64xf32>
    tpu.vector_store %arg6[%c0_6, %c0_7], %7 {strides = array<i32>} : memref<256x64xf32, #tpu.memory_space<vmem>>, vector<256x64xf32>,
    %c0_i32_8 = arith.constant 0 : i32
    %9 = arith.cmpi eq, %arg2, %c0_i32_8 : i32
    %10 = arith.extui %9 : i1 to i32
    %c0_i32_9 = arith.constant 0 : i32
    %11 = arith.cmpi ne, %10, %c0_i32_9 : i32
    scf.if %11 {
      %c0_10 = arith.constant 0 : index
      %c0_11 = arith.constant 0 : index
      %12 = vector.load %arg6[%c0_10, %c0_11] : memref<256x64xf32, #tpu.memory_space<vmem>>, vector<256x64xf32>
      %13 = arith.mulf %12, %12 : vector<256x64xf32>
      %14 = arith.mulf %12, %13 : vector<256x64xf32>
      %cst_12 = arith.constant 4.471500e-02 : f32
      %15 = vector.broadcast %cst_12 : f32 to vector<256x64xf32>
      %16 = arith.mulf %15, %14 : vector<256x64xf32>
      %17 = arith.addf %12, %16 : vector<256x64xf32>
      %cst_13 = arith.constant 0.797884583 : f32
      %18 = vector.broadcast %cst_13 : f32 to vector<256x64xf32>
      %19 = arith.mulf %18, %17 : vector<256x64xf32>
      %20 = math.tanh %19 : vector<256x64xf32>
      %cst_14 = arith.constant 1.000000e+00 : f32
      %21 = vector.broadcast %cst_14 : f32 to vector<256x64xf32>
      %22 = arith.addf %21, %20 : vector<256x64xf32>
      %cst_15 = arith.constant 5.000000e-01 : f32
      %23 = vector.broadcast %cst_15 : f32 to vector<256x64xf32>
      %24 = arith.mulf %23, %22 : vector<256x64xf32>
      %25 = arith.mulf %12, %24 : vector<256x64xf32>
      %26 = arith.truncf %25 : vector<256x64xf32> to vector<256x64xbf16>
      %c0_16 = arith.constant 0 : index
      %c0_17 = arith.constant 0 : index
      %27 = vector.load %arg5[%c0_16, %c0_17] : memref<256x64xbf16, #tpu.memory_space<vmem>>, vector<256x64xbf16>
      tpu.vector_store %arg5[%c0_16, %c0_17], %26 {strides = array<i32>} : memref<256x64xbf16, #tpu.memory_space<vmem>>, vector<256x64xbf16>,
    } else {
    }
    return
  }
  func.func @transform_0(%arg0: i32, %arg1: i32, %arg2: i32) -> (i32, i32) {
    %c0_i32 = arith.constant 0 : i32
    return %arg0, %arg2 : i32, i32
  }
  func.func @transform_1(%arg0: i32, %arg1: i32, %arg2: i32) -> (i32, i32) {
    %c0_i32 = arith.constant 0 : i32
    return %arg2, %arg1 : i32, i32
  }
  func.func @transform_2(%arg0: i32, %arg1: i32, %arg2: i32) -> (i32, i32) {
    %c0_i32 = arith.constant 0 : i32
    return %arg0, %arg1 : i32, i32
  }
}

</mosaic_0001>

<llo_original>
// kernel: _mm_call.1
$region0: #{_mm_call.1}
  #allocation0 [shape = 'u32[]', space=smem, size = 0x4, offset = 0x4, fixed_abs, tag = 'smem constant byte address 0x4 - core index']
  #allocation1 [shape = 'u32[144,128]{1,0:T(1,128)}', space=vmem, size = 0x12000, scoped, tag = 'internal scratch']
  #allocation2 [shape = 'f32[256,64]{1,0:T(8,128)}', space=vmem, size = 0x20000, scoped, tag = 'scratch operand']
  %s0 = inlined_call_operand.vmem [shape: bf16[512,48], index: 0, kind: input, shape index: {}]
  %s1 = inlined_call_operand.vmem [shape: bf16[48,64], index: 1, kind: input, shape index: {}]
  %s2 = inlined_call_operand.vmem [shape: bf16[512,64], index: 2, kind: output, shape index: {}]
  %s3 = sld [smem:[#allocation0]]
  $region49: #{_mm_call.1} parent=0
    _
  %s5 = ssub.s32 1, %s3
  %s6 = scalar_select 0, %s5, %s3
  loop: start=0, step=1, limit=4
  $region2: #{_mm_call.1} parent=0 // loop_pre_header
    _
  $region3: #{_mm_call.1} parent=0 // loop_header
    %s8 = sphi 0, %s12
    %p9 = scmp.ge.s32.totalorder %s8, 4
    %s15 = sphi 0, %s34
    %s16 = sphi 0, %s30
    %s17 = sphi 0, %s26
    %s18 = sphi 0, %s15
    %s19 = sphi 0, %s16
    %s20 = sphi 0, %s17
    %s21 = sphi 0, %s18
    %s22 = sphi 0, %s19
    %s23 = sphi 0, %s20
    %s39 = sphi 0, %s41
    %s42 = sphi 0, %s39
    %s43 = sphi 0, %s42
    %s59 = sphi 0, %s43
    %s67 = sphi 0, %s69
    %s70 = sphi 0, %s67
    %s71 = sphi 0, %s70
    %s87 = sphi 0, %s71
    %s95 = sphi 0, %s97
    %s98 = sphi 0, %s95
    %s99 = sphi 0, %s98
    %s115 = sphi 0, %s99
  $region4: #{_mm_call.1} parent=0 // loop_header_branch
    %11 = sbr.rel (%p9) target = $region8
  $region5: #{_mm_call.1} parent=0 // loop_body
    %s13 = ssub.s32 %s8, 1
    %s14 = ssub.s32 %s8, 2
    %s24 = sadd.s32 1, %s17
    %p25 = scmp.ge.s32.totalorder %s24, 1
    %s26 = scalar_select %p25, 0, %s24
    %s27 = sadd.s32 1, %s16
    %s28 = scalar_select %p25, %s27, %s16
    %p29 = scmp.ge.s32.totalorder %s28, 1
    %s30 = scalar_select %p29, 0, %s28
    %s31 = sadd.s32 1, %s15
    %s32 = scalar_select %p29, %s31, %s15
    %p33 = scmp.ge.s32.totalorder %s32, 2
    %s34 = scalar_select %p33, 0, %s32
    %s35 = ssub.s32 %s15, %s34
    %s36 = ssub.s32 %s17, %s26
    %s37 = sor.u32 %s35, %s36
    %p38 = scmp.eq.s32.totalorder %s37, 0
    %s40 = sadd.s32 %s39, 1
    %s41 = scalar_select %p38, %s39, %s40
    %p44 = pneg %p38
    %p45 = scmp.eq.s32.totalorder %s8, 1
    %p46 = por %p44, %p45
    %p47 = scmp.ne.s32.totalorder %s39, %s42
    %p48 = scmp.eq.s32.totalorder %s8, 0
    %p49 = por %p47, %p48
    %p50 = scmp.ne.s32.totalorder %s39, %s42
    %p51 = scmp.eq.s32.totalorder %s13, 1
    %p52 = por %p50, %p51
    %p53 = scmp.ne.s32.totalorder %s42, %s43
    %p54 = scmp.eq.s32.totalorder %s13, 0
    %p55 = por %p53, %p54
    %p56 = scmp.ne.s32.totalorder %s42, %s43
    %p57 = scmp.eq.s32.totalorder %s14, 1
    %p58 = por %p56, %p57
    %p60 = scmp.ne.s32.totalorder %s43, %s59
    %p61 = scmp.eq.s32.totalorder %s14, 0
    %p62 = por %p60, %p61
    %s63 = ssub.s32 %s17, %s26
    %s64 = ssub.s32 %s16, %s30
    %s65 = sor.u32 %s63, %s64
    %p66 = scmp.eq.s32.totalorder %s65, 0
    %s68 = sadd.s32 %s67, 1
    %s69 = scalar_select %p66, %s67, %s68
    %p72 = pneg %p66
    %p73 = scmp.eq.s32.totalorder %s8, 1
    %p74 = por %p72, %p73
    %p75 = scmp.ne.s32.totalorder %s67, %s70
    %p76 = scmp.eq.s32.totalorder %s8, 0
    %p77 = por %p75, %p76
    %p78 = scmp.ne.s32.totalorder %s67, %s70
    %p79 = scmp.eq.s32.totalorder %s13, 1
    %p80 = por %p78, %p79
    %p81 = scmp.ne.s32.totalorder %s70, %s71
    %p82 = scmp.eq.s32.totalorder %s13, 0
    %p83 = por %p81, %p82
    %p84 = scmp.ne.s32.totalorder %s70, %s71
    %p85 = scmp.eq.s32.totalorder %s14, 1
    %p86 = por %p84, %p85
    %p88 = scmp.ne.s32.totalorder %s71, %s87
    %p89 = scmp.eq.s32.totalorder %s14, 0
    %p90 = por %p88, %p89
    %s91 = ssub.s32 %s15, %s34
    %s92 = ssub.s32 %s16, %s30
    %s93 = sor.u32 %s91, %s92
    %p94 = scmp.eq.s32.totalorder %s93, 0
    %s96 = sadd.s32 %s95, 1
    %s97 = scalar_select %p94, %s95, %s96
    %p100 = pneg %p94
    %p101 = scmp.eq.s32.totalorder %s8, 1
    %p102 = por %p100, %p101
    %p103 = scmp.ne.s32.totalorder %s95, %s98
    %p104 = scmp.eq.s32.totalorder %s8, 0
    %p105 = por %p103, %p104
    %p106 = scmp.ne.s32.totalorder %s95, %s98
    %p107 = scmp.eq.s32.totalorder %s13, 1
    %p108 = por %p106, %p107
    %p109 = scmp.ne.s32.totalorder %s98, %s99
    %p110 = scmp.eq.s32.totalorder %s13, 0
    %p111 = por %p109, %p110
    %p112 = scmp.ne.s32.totalorder %s98, %s99
    %p113 = scmp.eq.s32.totalorder %s14, 1
    %p114 = por %p112, %p113
    %p116 = scmp.ne.s32.totalorder %s99, %s115
    %p117 = scmp.eq.s32.totalorder %s14, 0
    %p118 = por %p116, %p117
    %p119 = scmp.le.s32.totalorder 1, %s8
    %p120 = scmp.lt.s32.totalorder %s8, 3
    %p121 = pnand %p119, %p120
    %p122 = pneg %p121
    // Predicated region
    $region9: #{_mm_call.1} parent=5 // pred_check
      _
    $region10: #{_mm_call.1} parent=5 // pred_check_branch
      %124 = sbr.rel (%p121) target = $region12
    $region11: #{_mm_call.1} parent=5 // pred_region
      %s125 = ssub.s32 %s8, 1
      // Predicated region
      $region13: #{_mm_call.1} parent=11 // pred_check
        %p126 = pneg %p83
      $region14: #{_mm_call.1} parent=11 // pred_check_branch
        %128 = sbr.rel (%p126) target = $region16
      $region15: #{_mm_call.1} parent=11 // pred_region
        %s129 = smul.u32 6, %s20
        %p130 = scmp.lt.s32.totalorder %s129, 5
        %s131 = scalar_select %p130, %s129, 5
        %p132 = scmp.lt.s32.totalorder %s19, 0
        %s133 = scalar_select %p132, %s19, 0
        %s134 = sadd.s32 %s133, %s131
        %s135 = smul.addr %s134, 4
        %s136 = scalar_lea.vmem %s1, %s135
        %s137 = smul.u32 6, %s20
      $region16: #{_mm_call.1} parent=11 // pred_fallthru
        _
    $region12: #{_mm_call.1} parent=5 // pred_fallthru
      _
    %p138 = scmp.lt.s32.totalorder %s8, 2
    // Predicated region
    $region17: #{_mm_call.1} parent=5 // pred_check
      %p139 = pneg %p138
    $region18: #{_mm_call.1} parent=5 // pred_check_branch
      %141 = sbr.rel (%p139) target = $region20
    $region19: #{_mm_call.1} parent=5 // pred_region
      // Predicated region
      $region21: #{_mm_call.1} parent=19 // pred_check
        %p142 = pneg %p49
      $region22: #{_mm_call.1} parent=19 // pred_check_branch
        %144 = sbr.rel (%p142) target = $region24
      $region23: #{_mm_call.1} parent=19 // pred_region
        %s145 = smul.u32 32, %s15
        %p146 = scmp.lt.s32.totalorder %s145, 63
        %s147 = scalar_select %p146, %s145, 63
        %p148 = scmp.lt.s32.totalorder %s17, 0
        %s149 = scalar_select %p148, %s17, 0
        %s150 = sadd.s32 %s149, %s147
        %s151 = smul.addr %s150, 4
        %s152 = scalar_lea.vmem %s0, %s151
        %s153 = smul.u32 32, %s15
      $region24: #{_mm_call.1} parent=19 // pred_fallthru
        _
    $region20: #{_mm_call.1} parent=5 // pred_fallthru
      _
    %p154 = scmp.le.s32.totalorder 1, %s8
    %p155 = scmp.lt.s32.totalorder %s8, 3
    %p156 = pnand %p154, %p155
    %p157 = pneg %p156
    // Predicated region
    $region25: #{_mm_call.1} parent=5 // pred_check
      _
    $region26: #{_mm_call.1} parent=5 // pred_check_branch
      %159 = sbr.rel (%p156) target = $region28
    $region27: #{_mm_call.1} parent=5 // pred_region
      %s160 = ssub.s32 %s8, 1
      %s161 = smul.u32 32, %s18
      %p162 = scmp.lt.s32.totalorder %s161, 63
      %s163 = scalar_select %p162, %s161, 63
      %p164 = scmp.lt.s32.totalorder %s20, 0
      %s165 = scalar_select %p164, %s20, 0
      %s166 = sadd.s32 %s165, %s163
      %s167 = smul.addr %s166, 4
      %s168 = scalar_lea.vmem %s0, %s167
      %p169 = pneg %p55
      %p170 = pneg %p52
      %s171 = smul.u32 6, %s20
      %p172 = scmp.lt.s32.totalorder %s171, 5
      %s173 = scalar_select %p172, %s171, 5
      %p174 = scmp.lt.s32.totalorder %s19, 0
      %s175 = scalar_select %p174, %s19, 0
      %s176 = sadd.s32 %s175, %s173
      %s177 = smul.addr %s176, 4
      %s178 = scalar_lea.vmem %s1, %s177
      %p179 = pneg %p83
      %p180 = pneg %p80
      %p181 = pneg %p111
      %p182 = pneg %p108
      %s183 = smul.u32 32, %s18
      %p184 = scmp.lt.s32.totalorder %s183, 63
      %s185 = scalar_select %p184, %s183, 63
      %p186 = scmp.lt.s32.totalorder %s19, 0
      %s187 = scalar_select %p186, %s19, 0
      %s188 = sadd.s32 %s187, %s185
      %s189 = smul.addr %s188, 4
      %s190 = scalar_lea.vmem %s2, %s189
      %s191 = smul.u32 32, %s18
      %p192 = scmp.lt.s32.totalorder %s191, 63
      %s193 = scalar_select %p192, %s191, 63
      %p194 = scmp.lt.s32.totalorder %s20, 0
      %s195 = scalar_select %p194, %s20, 0
      %s196 = sadd.s32 %s195, %s193
      %s197 = smul.addr %s196, 4
      %s198 = scalar_lea.vmem %s0, %s197
      %s199 = smul.u32 32, %s18
      %s200 = smul.u32 6, %s20
      %p201 = scmp.lt.s32.totalorder %s200, 5
      %s202 = scalar_select %p201, %s200, 5
      %p203 = scmp.lt.s32.totalorder %s19, 0
      %s204 = scalar_select %p203, %s19, 0
      %s205 = sadd.s32 %s204, %s202
      %s206 = smul.addr %s205, 4
      %s207 = scalar_lea.vmem %s1, %s206
      %s208 = smul.u32 6, %s20
      %s209 = smul.u32 32, %s18
      %p210 = scmp.lt.s32.totalorder %s209, 63
      %s211 = scalar_select %p210, %s209, 63
      %p212 = scmp.lt.s32.totalorder %s19, 0
      %s213 = scalar_select %p212, %s19, 0
      %s214 = sadd.s32 %s213, %s211
      %s215 = smul.addr %s214, 4
      %s216 = scalar_lea.vmem %s2, %s215
      %s217 = smul.u32 32, %s18
      %p219 = scmp.eq.s32.totalorder %s20, 0
      // Predicated region
      $region29: #{_mm_call.1} parent=27 // pred_check
        %p220 = pneg %p219
      $region30: #{_mm_call.1} parent=27 // pred_check_branch
        %222 = sbr.rel (%p220) target = $region32
      $region31: #{_mm_call.1} parent=27 // pred_region
        %vm223 = vcmask 523264
        %224 = vst.msk [vmem:[#allocation2] sm:$0xff] %vm223, 0.0
        %225 = vst.msk [vmem:[#allocation2 + $0x8] sm:$0xff] %vm223, 0.0
        %226 = vst.msk [vmem:[#allocation2 + $0x10] sm:$0xff] %vm223, 0.0
        %227 = vst.msk [vmem:[#allocation2 + $0x18] sm:$0xff] %vm223, 0.0
        %228 = vst.msk [vmem:[#allocation2 + $0x20] sm:$0xff] %vm223, 0.0
        %229 = vst.msk [vmem:[#allocation2 + $0x28] sm:$0xff] %vm223, 0.0
        %230 = vst.msk [vmem:[#allocation2 + $0x30] sm:$0xff] %vm223, 0.0
        %231 = vst.msk [vmem:[#allocation2 + $0x38] sm:$0xff] %vm223, 0.0
        %232 = vst.msk [vmem:[#allocation2 + $0x40] sm:$0xff] %vm223, 0.0
        %233 = vst.msk [vmem:[#allocation2 + $0x48] sm:$0xff] %vm223, 0.0
        %234 = vst.msk [vmem:[#allocation2 + $0x50] sm:$0xff] %vm223, 0.0
        %235 = vst.msk [vmem:[#allocation2 + $0x58] sm:$0xff] %vm223, 0.0
        %236 = vst.msk [vmem:[#allocation2 + $0x60] sm:$0xff] %vm223, 0.0
        %237 = vst.msk [vmem:[#allocation2 + $0x68] sm:$0xff] %vm223, 0.0
        %238 = vst.msk [vmem:[#allocation2 + $0x70] sm:$0xff] %vm223, 0.0
        %239 = vst.msk [vmem:[#allocation2 + $0x78] sm:$0xff] %vm223, 0.0
        %240 = vst.msk [vmem:[#allocation2 + $0x80] sm:$0xff] %vm223, 0.0
        %241 = vst.msk [vmem:[#allocation2 + $0x88] sm:$0xff] %vm223, 0.0
        %242 = vst.msk [vmem:[#allocation2 + $0x90] sm:$0xff] %vm223, 0.0
        %243 = vst.msk [vmem:[#allocation2 + $0x98] sm:$0xff] %vm223, 0.0
        %244 = vst.msk [vmem:[#allocation2 + $0xa0] sm:$0xff] %vm223, 0.0
        %245 = vst.msk [vmem:[#allocation2 + $0xa8] sm:$0xff] %vm223, 0.0
        %246 = vst.msk [vmem:[#allocation2 + $0xb0] sm:$0xff] %vm223, 0.0
        %247 = vst.msk [vmem:[#allocation2 + $0xb8] sm:$0xff] %vm223, 0.0
        %248 = vst.msk [vmem:[#allocation2 + $0xc0] sm:$0xff] %vm223, 0.0
        %249 = vst.msk [vmem:[#allocation2 + $0xc8] sm:$0xff] %vm223, 0.0
        %250 = vst.msk [vmem:[#allocation2 + $0xd0] sm:$0xff] %vm223, 0.0
        %251 = vst.msk [vmem:[#allocation2 + $0xd8] sm:$0xff] %vm223, 0.0
        %252 = vst.msk [vmem:[#allocation2 + $0xe0] sm:$0xff] %vm223, 0.0
        %253 = vst.msk [vmem:[#allocation2 + $0xe8] sm:$0xff] %vm223, 0.0
        %254 = vst.msk [vmem:[#allocation2 + $0xf0] sm:$0xff] %vm223, 0.0
        %255 = vst.msk [vmem:[#allocation2 + $0xf8] sm:$0xff] %vm223, 0.0
      $region32: #{_mm_call.1} parent=27 // pred_fallthru
        _
      %v256 = vld [vmem:[#allocation2] sm:$0xff]
      %v257 = vld [vmem:[#allocation2 + $0x8] sm:$0xff]
      %v258 = vld [vmem:[#allocation2 + $0x10] sm:$0xff]
      %v259 = vld [vmem:[#allocation2 + $0x18] sm:$0xff]
      %v260 = vld [vmem:[#allocation2 + $0x20] sm:$0xff]
      %v261 = vld [vmem:[#allocation2 + $0x28] sm:$0xff]
      %v262 = vld [vmem:[#allocation2 + $0x30] sm:$0xff]
      %v263 = vld [vmem:[#allocation2 + $0x38] sm:$0xff]
      %v264 = vld [vmem:[#allocation2 + $0x40] sm:$0xff]
      %v265 = vld [vmem:[#allocation2 + $0x48] sm:$0xff]
      %v266 = vld [vmem:[#allocation2 + $0x50] sm:$0xff]
      %v267 = vld [vmem:[#allocation2 + $0x58] sm:$0xff]
      %v268 = vld [vmem:[#allocation2 + $0x60] sm:$0xff]
      %v269 = vld [vmem:[#allocation2 + $0x68] sm:$0xff]
      %v270 = vld [vmem:[#allocation2 + $0x70] sm:$0xff]
      %v271 = vld [vmem:[#allocation2 + $0x78] sm:$0xff]
      %v272 = vld [vmem:[#allocation2 + $0x80] sm:$0xff]
      %v273 = vld [vmem:[#allocation2 + $0x88] sm:$0xff]
      %v274 = vld [vmem:[#allocation2 + $0x90] sm:$0xff]
      %v275 = vld [vmem:[#allocation2 + $0x98] sm:$0xff]
      %v276 = vld [vmem:[#allocation2 + $0xa0] sm:$0xff]
      %v277 = vld [vmem:[#allocation2 + $0xa8] sm:$0xff]
      %v278 = vld [vmem:[#allocation2 + $0xb0] sm:$0xff]
      %v279 = vld [vmem:[#allocation2 + $0xb8] sm:$0xff]
      %v280 = vld [vmem:[#allocation2 + $0xc0] sm:$0xff]
      %v281 = vld [vmem:[#allocation2 + $0xc8] sm:$0xff]
      %v282 = vld [vmem:[#allocation2 + $0xd0] sm:$0xff]
      %v283 = vld [vmem:[#allocation2 + $0xd8] sm:$0xff]
      %v284 = vld [vmem:[#allocation2 + $0xe0] sm:$0xff]
      %v285 = vld [vmem:[#allocation2 + $0xe8] sm:$0xff]
      %v286 = vld [vmem:[#allocation2 + $0xf0] sm:$0xff]
      %v287 = vld [vmem:[#allocation2 + $0xf8] sm:$0xff]
      %v288 = vld [vmem:[%s198] sm:$0xf]
      %v289 = vld [vmem:[%s198 + $0x4] sm:$0xf]
      %v290 = vld [vmem:[%s198 + $0x8] sm:$0xf]
      %v291 = vld [vmem:[%s198 + $0xc] sm:$0xf]
      %v292 = vld [vmem:[%s198 + $0x10] sm:$0xf]
      %v293 = vld [vmem:[%s198 + $0x14] sm:$0xf]
      %v294 = vld [vmem:[%s198 + $0x18] sm:$0xf]
      %v295 = vld [vmem:[%s198 + $0x1c] sm:$0xf]
      %v296 = vld [vmem:[%s198 + $0x20] sm:$0xf]
      %v297 = vld [vmem:[%s198 + $0x24] sm:$0xf]
      %v298 = vld [vmem:[%s198 + $0x28] sm:$0xf]
      %v299 = vld [vmem:[%s198 + $0x2c] sm:$0xf]
      %v300 = vld [vmem:[%s198 + $0x30] sm:$0xf]
      %v301 = vld [vmem:[%s198 + $0x34] sm:$0xf]
      %v302 = vld [vmem:[%s198 + $0x38] sm:$0xf]
      %v303 = vld [vmem:[%s198 + $0x3c] sm:$0xf]
      %v304 = vld [vmem:[%s198 + $0x40] sm:$0xf]
      %v305 = vld [vmem:[%s198 + $0x44] sm:$0xf]
      %v306 = vld [vmem:[%s198 + $0x48] sm:$0xf]
      %v307 = vld [vmem:[%s198 + $0x4c] sm:$0xf]
      %v308 = vld [vmem:[%s198 + $0x50] sm:$0xf]
      %v309 = vld [vmem:[%s198 + $0x54] sm:$0xf]
      %v310 = vld [vmem:[%s198 + $0x58] sm:$0xf]
      %v311 = vld [vmem:[%s198 + $0x5c] sm:$0xf]
      %v312 = vld [vmem:[%s198 + $0x60] sm:$0xf]
      %v313 = vld [vmem:[%s198 + $0x64] sm:$0xf]
      %v314 = vld [vmem:[%s198 + $0x68] sm:$0xf]
      %v315 = vld [vmem:[%s198 + $0x6c] sm:$0xf]
      %v316 = vld [vmem:[%s198 + $0x70] sm:$0xf]
      %v317 = vld [vmem:[%s198 + $0x74] sm:$0xf]
      %v318 = vld [vmem:[%s198 + $0x78] sm:$0xf]
      %v319 = vld [vmem:[%s198 + $0x7c] sm:$0xf]
      %v320 = vld [vmem:[%s207] sm:$0xf]
      %v321 = vld [vmem:[%s207 + $0x4] sm:$0xf]
      %v322 = vld [vmem:[%s207 + $0x8] sm:$0xf]
      %v323 = vld [vmem:[%s207 + $0xc] sm:$0xf]
      %v324 = vld [vmem:[%s207 + $0x10] sm:$0xf]
      %v325 = vld [vmem:[%s207 + $0x14] sm:$0xf]
      %v358 = vunpack.c.l.b16 %v288
      %v359 = vunpack.c.l.b16 %v289
      %v360 = vunpack.c.l.b16 %v290
      %v361 = vunpack.c.l.b16 %v291
      %v362 = vunpack.c.l.b16 %v292
      %v363 = vunpack.c.l.b16 %v293
      %v364 = vunpack.c.l.b16 %v294
      %v365 = vunpack.c.l.b16 %v295
      %v366 = vunpack.c.l.b16 %v296
      %v367 = vunpack.c.l.b16 %v297
      %v368 = vunpack.c.l.b16 %v298
      %v369 = vunpack.c.l.b16 %v299
      %v370 = vunpack.c.l.b16 %v300
      %v371 = vunpack.c.l.b16 %v301
      %v372 = vunpack.c.l.b16 %v302
      %v373 = vunpack.c.l.b16 %v303
      %v374 = vunpack.c.l.b16 %v304
      %v375 = vunpack.c.l.b16 %v305
      %v376 = vunpack.c.l.b16 %v306
      %v377 = vunpack.c.l.b16 %v307
      %v378 = vunpack.c.l.b16 %v308
      %v379 = vunpack.c.l.b16 %v309
      %v380 = vunpack.c.l.b16 %v310
      %v381 = vunpack.c.l.b16 %v311
      %v382 = vunpack.c.l.b16 %v312
      %v383 = vunpack.c.l.b16 %v313
      %v384 = vunpack.c.l.b16 %v314
      %v385 = vunpack.c.l.b16 %v315
      %v386 = vunpack.c.l.b16 %v316
      %v387 = vunpack.c.l.b16 %v317
      %v388 = vunpack.c.l.b16 %v318
      %v389 = vunpack.c.l.b16 %v319
      %v390 = vpack.c.b16 %v359, %v358
      %v391 = vpack.c.b16 %v361, %v360
      %v392 = vpack.c.b16 %v363, %v362
      %v393 = vpack.c.b16 %v365, %v364
      %v394 = vpack.c.b16 %v367, %v366
      %v395 = vpack.c.b16 %v369, %v368
      %v396 = vpack.c.b16 %v371, %v370
      %v397 = vpack.c.b16 %v373, %v372
      %v398 = vpack.c.b16 %v375, %v374
      %v399 = vpack.c.b16 %v377, %v376
      %v400 = vpack.c.b16 %v379, %v378
      %v401 = vpack.c.b16 %v381, %v380
      %v402 = vpack.c.b16 %v383, %v382
      %v403 = vpack.c.b16 %v385, %v384
      %v404 = vpack.c.b16 %v387, %v386
      %v405 = vpack.c.b16 %v389, %v388
      %v412 = vunpack.c.l.b16 %v320
      %v413 = vunpack.c.l.b16 %v321
      %v414 = vunpack.c.l.b16 %v322
      %v415 = vunpack.c.l.b16 %v323
      %v416 = vunpack.c.l.b16 %v324
      %v417 = vunpack.c.l.b16 %v325
      %v418 = vpack.c.b16 %v413, %v412
      %v419 = vpack.c.b16 %v415, %v414
      %v420 = vpack.c.b16 %v417, %v416
      %vm424 = vcmask 392192
      %v426 = vsel %vm424, %v390, 0
      %v429 = vsel %vm424, %v391, 0
      %v432 = vsel %vm424, %v392, 0
      %v435 = vsel %vm424, %v393, 0
      %v438 = vsel %vm424, %v394, 0
      %v441 = vsel %vm424, %v395, 0
      %v444 = vsel %vm424, %v396, 0
      %v447 = vsel %vm424, %v397, 0
      %v450 = vsel %vm424, %v398, 0
      %v453 = vsel %vm424, %v399, 0
      %v456 = vsel %vm424, %v400, 0
      %v459 = vsel %vm424, %v401, 0
      %v462 = vsel %vm424, %v402, 0
      %v465 = vsel %vm424, %v403, 0
      %v468 = vsel %vm424, %v404, 0
      %v471 = vsel %vm424, %v405, 0
      %473 = vmatprep.subr.bf16.mxu0 0
      %474 = vmatpush1.bf16.msra.mxu0 0
      %475 = vmatprep.subr.bf16.mxu0 0
      %476 = vmatpush1.bf16.msra.mxu0 0
      %477 = vmatprep.subr.bf16.mxu0 0
      %478 = vmatpush1.bf16.msra.mxu0 0
      %479 = vmatprep.subr.bf16.mxu0 0
      %480 = vmatpush1.bf16.msra.mxu0 0
      %481 = vmatprep.subr.bf16.mxu0 0
      %482 = vmatpush1.bf16.msra.mxu0 0
      %483 = vmatprep.subr.bf16.mxu0 0
      %484 = vmatpush1.bf16.msra.mxu0 %v420
      %485 = vmatprep.subr.bf16.mxu0 0
      %486 = vmatpush1.bf16.msra.mxu0 %v419
      %487 = vmatprep.subr.bf16.mxu0 0
      %488 = vmatpush1.bf16.msra.mxu0 %v418
      %489 = vmatprep.subr.bf16.mxu0 0
      %490 = vmatpush2.bf16.msra.mxu0 0
      %491 = vmatprep.subr.bf16.mxu0 0
      %492 = vmatpush2.bf16.msra.mxu0 0
      %493 = vmatprep.subr.bf16.mxu0 0
      %494 = vmatpush2.bf16.msra.mxu0 0
      %495 = vmatprep.subr.bf16.mxu0 0
      %496 = vmatpush2.bf16.msra.mxu0 0
      %497 = vmatprep.subr.bf16.mxu0 0
      %498 = vmatpush2.bf16.msra.mxu0 0
      %499 = vmatprep.subr.bf16.mxu0 0
      %500 = vmatpush2.bf16.msra.mxu0 0
      %501 = vmatprep.subr.bf16.mxu0 0
      %502 = vmatpush2.bf16.msra.mxu0 0
      %503 = vmatprep.subr.bf16.mxu0 0
      %504 = vmatpush2.bf16.msra.mxu0 0
      %505 = vmatprep.mubr.bf16.mxu0 0
      %506 = vmatmul.mubr.bf16.gmra.mxu0 %v426
      %v507 = vpop.f32.mrf.mxu0
      %v508 = vadd.f32 0.0, %v507
      %v509 = vpop.f32.mrf.mxu0
      %v510 = vpop.f32.mrf.mxu0
      %v511 = vadd.f32 0.0, %v510
      %v512 = vpop.f32.mrf.mxu0
      %513 = vmatprep.mubr.bf16.mxu0 0
      %514 = vmatmul.mubr.bf16.gmra.mxu0 %v429
      %v515 = vpop.f32.mrf.mxu0
      %v516 = vadd.f32 0.0, %v515
      %v517 = vpop.f32.mrf.mxu0
      %v518 = vpop.f32.mrf.mxu0
      %v519 = vadd.f32 0.0, %v518
      %v520 = vpop.f32.mrf.mxu0
      %521 = vmatprep.mubr.bf16.mxu0 0
      %522 = vmatmul.mubr.bf16.gmra.mxu0 %v432
      %v523 = vpop.f32.mrf.mxu0
      %v524 = vadd.f32 0.0, %v523
      %v525 = vpop.f32.mrf.mxu0
      %v526 = vpop.f32.mrf.mxu0
      %v527 = vadd.f32 0.0, %v526
      %v528 = vpop.f32.mrf.mxu0
      %529 = vmatprep.mubr.bf16.mxu0 0
      %530 = vmatmul.mubr.bf16.gmra.mxu0 %v435
      %v531 = vpop.f32.mrf.mxu0
      %v532 = vadd.f32 0.0, %v531
      %v533 = vpop.f32.mrf.mxu0
      %v534 = vpop.f32.mrf.mxu0
      %v535 = vadd.f32 0.0, %v534
      %v536 = vpop.f32.mrf.mxu0
      %537 = vmatprep.mubr.bf16.mxu0 0
      %538 = vmatmul.mubr.bf16.gmra.mxu0 %v438
      %v539 = vpop.f32.mrf.mxu0
      %v540 = vadd.f32 0.0, %v539
      %v541 = vpop.f32.mrf.mxu0
      %v542 = vpop.f32.mrf.mxu0
      %v543 = vadd.f32 0.0, %v542
      %v544 = vpop.f32.mrf.mxu0
      %545 = vmatprep.mubr.bf16.mxu0 0
      %546 = vmatmul.mubr.bf16.gmra.mxu0 %v441
      %v547 = vpop.f32.mrf.mxu0
      %v548 = vadd.f32 0.0, %v547
      %v549 = vpop.f32.mrf.mxu0
      %v550 = vpop.f32.mrf.mxu0
      %v551 = vadd.f32 0.0, %v550
      %v552 = vpop.f32.mrf.mxu0
      %553 = vmatprep.mubr.bf16.mxu0 0
      %554 = vmatmul.mubr.bf16.gmra.mxu0 %v444
      %v555 = vpop.f32.mrf.mxu0
      %v556 = vadd.f32 0.0, %v555
      %v557 = vpop.f32.mrf.mxu0
      %v558 = vpop.f32.mrf.mxu0
      %v559 = vadd.f32 0.0, %v558
      %v560 = vpop.f32.mrf.mxu0
      %561 = vmatprep.mubr.bf16.mxu0 0
      %562 = vmatmul.mubr.bf16.gmra.mxu0 %v447
      %v563 = vpop.f32.mrf.mxu0
      %v564 = vadd.f32 0.0, %v563
      %v565 = vpop.f32.mrf.mxu0
      %v566 = vpop.f32.mrf.mxu0
      %v567 = vadd.f32 0.0, %v566
      %v568 = vpop.f32.mrf.mxu0
      %569 = vmatprep.mubr.bf16.mxu0 0
      %570 = vmatmul.mubr.bf16.gmra.mxu0 %v450
      %v571 = vpop.f32.mrf.mxu0
      %v572 = vadd.f32 0.0, %v571
      %v573 = vpop.f32.mrf.mxu0
      %v574 = vpop.f32.mrf.mxu0
      %v575 = vadd.f32 0.0, %v574
      %v576 = vpop.f32.mrf.mxu0
      %577 = vmatprep.mubr.bf16.mxu0 0
      %578 = vmatmul.mubr.bf16.gmra.mxu0 %v453
      %v579 = vpop.f32.mrf.mxu0
      %v580 = vadd.f32 0.0, %v579
      %v581 = vpop.f32.mrf.mxu0
      %v582 = vpop.f32.mrf.mxu0
      %v583 = vadd.f32 0.0, %v582
      %v584 = vpop.f32.mrf.mxu0
      %585 = vmatprep.mubr.bf16.mxu0 0
      %586 = vmatmul.mubr.bf16.gmra.mxu0 %v456
      %v587 = vpop.f32.mrf.mxu0
      %v588 = vadd.f32 0.0, %v587
      %v589 = vpop.f32.mrf.mxu0
      %v590 = vpop.f32.mrf.mxu0
      %v591 = vadd.f32 0.0, %v590
      %v592 = vpop.f32.mrf.mxu0
      %593 = vmatprep.mubr.bf16.mxu0 0
      %594 = vmatmul.mubr.bf16.gmra.mxu0 %v459
      %v595 = vpop.f32.mrf.mxu0
      %v596 = vadd.f32 0.0, %v595
      %v597 = vpop.f32.mrf.mxu0
      %v598 = vpop.f32.mrf.mxu0
      %v599 = vadd.f32 0.0, %v598
      %v600 = vpop.f32.mrf.mxu0
      %601 = vmatprep.mubr.bf16.mxu0 0
      %602 = vmatmul.mubr.bf16.gmra.mxu0 %v462
      %v603 = vpop.f32.mrf.mxu0
      %v604 = vadd.f32 0.0, %v603
      %v605 = vpop.f32.mrf.mxu0
      %v606 = vpop.f32.mrf.mxu0
      %v607 = vadd.f32 0.0, %v606
      %v608 = vpop.f32.mrf.mxu0
      %609 = vmatprep.mubr.bf16.mxu0 0
      %610 = vmatmul.mubr.bf16.gmra.mxu0 %v465
      %v611 = vpop.f32.mrf.mxu0
      %v612 = vadd.f32 0.0, %v611
      %v613 = vpop.f32.mrf.mxu0
      %v614 = vpop.f32.mrf.mxu0
      %v615 = vadd.f32 0.0, %v614
      %v616 = vpop.f32.mrf.mxu0
      %617 = vmatprep.mubr.bf16.mxu0 0
      %618 = vmatmul.mubr.bf16.gmra.mxu0 %v468
      %v619 = vpop.f32.mrf.mxu0
      %v620 = vadd.f32 0.0, %v619
      %v621 = vpop.f32.mrf.mxu0
      %v622 = vpop.f32.mrf.mxu0
      %v623 = vadd.f32 0.0, %v622
      %v624 = vpop.f32.mrf.mxu0
      %625 = vmatprep.mubr.bf16.mxu0 0
      %626 = vmatmul.mubr.bf16.gmra.mxu0 %v471
      %v627 = vpop.f32.mrf.mxu0
      %v628 = vadd.f32 0.0, %v627
      %v629 = vpop.f32.mrf.mxu0
      %v630 = vpop.f32.mrf.mxu0
      %v631 = vadd.f32 0.0, %v630
      %v632 = vpop.f32.mrf.mxu0
      %633 = vdwg.mxu0
      %v634 = vadd.f32 %v256, %v508
      %v635 = vadd.f32 %v257, %v511
      %v636 = vadd.f32 %v258, %v516
      %v637 = vadd.f32 %v259, %v519
      %v638 = vadd.f32 %v260, %v524
      %v639 = vadd.f32 %v261, %v527
      %v640 = vadd.f32 %v262, %v532
      %v641 = vadd.f32 %v263, %v535
      %v642 = vadd.f32 %v264, %v540
      %v643 = vadd.f32 %v265, %v543
      %v644 = vadd.f32 %v266, %v548
      %v645 = vadd.f32 %v267, %v551
      %v646 = vadd.f32 %v268, %v556
      %v647 = vadd.f32 %v269, %v559
      %v648 = vadd.f32 %v270, %v564
      %v649 = vadd.f32 %v271, %v567
      %v650 = vadd.f32 %v272, %v572
      %v651 = vadd.f32 %v273, %v575
      %v652 = vadd.f32 %v274, %v580
      %v653 = vadd.f32 %v275, %v583
      %v654 = vadd.f32 %v276, %v588
      %v655 = vadd.f32 %v277, %v591
      %v656 = vadd.f32 %v278, %v596
      %v657 = vadd.f32 %v279, %v599
      %v658 = vadd.f32 %v280, %v604
      %v659 = vadd.f32 %v281, %v607
      %v660 = vadd.f32 %v282, %v612
      %v661 = vadd.f32 %v283, %v615
      %v662 = vadd.f32 %v284, %v620
      %v663 = vadd.f32 %v285, %v623
      %v664 = vadd.f32 %v286, %v628
      %v665 = vadd.f32 %v287, %v631
      %vm666 = vcmask 523264
      %667 = vst.msk [vmem:[#allocation2] sm:$0xff] %vm666, %v634
      %668 = vst.msk [vmem:[#allocation2 + $0x8] sm:$0xff] %vm666, %v635
      %669 = vst.msk [vmem:[#allocation2 + $0x10] sm:$0xff] %vm666, %v636
      %670 = vst.msk [vmem:[#allocation2 + $0x18] sm:$0xff] %vm666, %v637
      %671 = vst.msk [vmem:[#allocation2 + $0x20] sm:$0xff] %vm666, %v638
      %672 = vst.msk [vmem:[#allocation2 + $0x28] sm:$0xff] %vm666, %v639
      %673 = vst.msk [vmem:[#allocation2 + $0x30] sm:$0xff] %vm666, %v640
      %674 = vst.msk [vmem:[#allocation2 + $0x38] sm:$0xff] %vm666, %v641
      %675 = vst.msk [vmem:[#allocation2 + $0x40] sm:$0xff] %vm666, %v642
      %676 = vst.msk [vmem:[#allocation2 + $0x48] sm:$0xff] %vm666, %v643
      %677 = vst.msk [vmem:[#allocation2 + $0x50] sm:$0xff] %vm666, %v644
      %678 = vst.msk [vmem:[#allocation2 + $0x58] sm:$0xff] %vm666, %v645
      %679 = vst.msk [vmem:[#allocation2 + $0x60] sm:$0xff] %vm666, %v646
      %680 = vst.msk [vmem:[#allocation2 + $0x68] sm:$0xff] %vm666, %v647
      %681 = vst.msk [vmem:[#allocation2 + $0x70] sm:$0xff] %vm666, %v648
      %682 = vst.msk [vmem:[#allocation2 + $0x78] sm:$0xff] %vm666, %v649
      %683 = vst.msk [vmem:[#allocation2 + $0x80] sm:$0xff] %vm666, %v650
      %684 = vst.msk [vmem:[#allocation2 + $0x88] sm:$0xff] %vm666, %v651
      %685 = vst.msk [vmem:[#allocation2 + $0x90] sm:$0xff] %vm666, %v652
      %686 = vst.msk [vmem:[#allocation2 + $0x98] sm:$0xff] %vm666, %v653
      %687 = vst.msk [vmem:[#allocation2 + $0xa0] sm:$0xff] %vm666, %v654
      %688 = vst.msk [vmem:[#allocation2 + $0xa8] sm:$0xff] %vm666, %v655
      %689 = vst.msk [vmem:[#allocation2 + $0xb0] sm:$0xff] %vm666, %v656
      %690 = vst.msk [vmem:[#allocation2 + $0xb8] sm:$0xff] %vm666, %v657
      %691 = vst.msk [vmem:[#allocation2 + $0xc0] sm:$0xff] %vm666, %v658
      %692 = vst.msk [vmem:[#allocation2 + $0xc8] sm:$0xff] %vm666, %v659
      %693 = vst.msk [vmem:[#allocation2 + $0xd0] sm:$0xff] %vm666, %v660
      %694 = vst.msk [vmem:[#allocation2 + $0xd8] sm:$0xff] %vm666, %v661
      %695 = vst.msk [vmem:[#allocation2 + $0xe0] sm:$0xff] %vm666, %v662
      %696 = vst.msk [vmem:[#allocation2 + $0xe8] sm:$0xff] %vm666, %v663
      %697 = vst.msk [vmem:[#allocation2 + $0xf0] sm:$0xff] %vm666, %v664
      %698 = vst.msk [vmem:[#allocation2 + $0xf8] sm:$0xff] %vm666, %v665
      // Predicated region
      $region33: #{_mm_call.1} parent=27 // pred_check
        %p699 = pneg %p219
      $region34: #{_mm_call.1} parent=27 // pred_check_branch
        %701 = sbr.rel (%p699) target = $region36
      $region35: #{_mm_call.1} parent=27 // pred_region
        %v702 = vld [vmem:[#allocation2] sm:$0xff]
        %v703 = vld [vmem:[#allocation2 + $0x8] sm:$0xff]
        %v704 = vld [vmem:[#allocation2 + $0x10] sm:$0xff]
        %v705 = vld [vmem:[#allocation2 + $0x18] sm:$0xff]
        %v706 = vld [vmem:[#allocation2 + $0x20] sm:$0xff]
        %v707 = vld [vmem:[#allocation2 + $0x28] sm:$0xff]
        %v708 = vld [vmem:[#allocation2 + $0x30] sm:$0xff]
        %v709 = vld [vmem:[#allocation2 + $0x38] sm:$0xff]
        %v710 = vld [vmem:[#allocation2 + $0x40] sm:$0xff]
        %v711 = vld [vmem:[#allocation2 + $0x48] sm:$0xff]
        %v712 = vld [vmem:[#allocation2 + $0x50] sm:$0xff]
        %v713 = vld [vmem:[#allocation2 + $0x58] sm:$0xff]
        %v714 = vld [vmem:[#allocation2 + $0x60] sm:$0xff]
        %v715 = vld [vmem:[#allocation2 + $0x68] sm:$0xff]
        %v716 = vld [vmem:[#allocation2 + $0x70] sm:$0xff]
        %v717 = vld [vmem:[#allocation2 + $0x78] sm:$0xff]
        %v718 = vld [vmem:[#allocation2 + $0x80] sm:$0xff]
        %v719 = vld [vmem:[#allocation2 + $0x88] sm:$0xff]
        %v720 = vld [vmem:[#allocation2 + $0x90] sm:$0xff]
        %v721 = vld [vmem:[#allocation2 + $0x98] sm:$0xff]
        %v722 = vld [vmem:[#allocation2 + $0xa0] sm:$0xff]
        %v723 = vld [vmem:[#allocation2 + $0xa8] sm:$0xff]
        %v724 = vld [vmem:[#allocation2 + $0xb0] sm:$0xff]
        %v725 = vld [vmem:[#allocation2 + $0xb8] sm:$0xff]
        %v726 = vld [vmem:[#allocation2 + $0xc0] sm:$0xff]
        %v727 = vld [vmem:[#allocation2 + $0xc8] sm:$0xff]
        %v728 = vld [vmem:[#allocation2 + $0xd0] sm:$0xff]
        %v729 = vld [vmem:[#allocation2 + $0xd8] sm:$0xff]
        %v730 = vld [vmem:[#allocation2 + $0xe0] sm:$0xff]
        %v731 = vld [vmem:[#allocation2 + $0xe8] sm:$0xff]
        %v732 = vld [vmem:[#allocation2 + $0xf0] sm:$0xff]
        %v733 = vld [vmem:[#allocation2 + $0xf8] sm:$0xff]
        %v734 = vmul.f32 %v702, %v702
        %v735 = vmul.f32 %v703, %v703
        %v736 = vmul.f32 %v704, %v704
        %v737 = vmul.f32 %v705, %v705
        %v738 = vmul.f32 %v706, %v706
        %v739 = vmul.f32 %v707, %v707
        %v740 = vmul.f32 %v708, %v708
        %v741 = vmul.f32 %v709, %v709
        %v742 = vmul.f32 %v710, %v710
        %v743 = vmul.f32 %v711, %v711
        %v744 = vmul.f32 %v712, %v712
        %v745 = vmul.f32 %v713, %v713
        %v746 = vmul.f32 %v714, %v714
        %v747 = vmul.f32 %v715, %v715
        %v748 = vmul.f32 %v716, %v716
        %v749 = vmul.f32 %v717, %v717
        %v750 = vmul.f32 %v718, %v718
        %v751 = vmul.f32 %v719, %v719
        %v752 = vmul.f32 %v720, %v720
        %v753 = vmul.f32 %v721, %v721
        %v754 = vmul.f32 %v722, %v722
        %v755 = vmul.f32 %v723, %v723
        %v756 = vmul.f32 %v724, %v724
        %v757 = vmul.f32 %v725, %v725
        %v758 = vmul.f32 %v726, %v726
        %v759 = vmul.f32 %v727, %v727
        %v760 = vmul.f32 %v728, %v728
        %v761 = vmul.f32 %v729, %v729
        %v762 = vmul.f32 %v730, %v730
        %v763 = vmul.f32 %v731, %v731
        %v764 = vmul.f32 %v732, %v732
        %v765 = vmul.f32 %v733, %v733
        %v766 = vmul.f32 %v702, %v734
        %v767 = vmul.f32 %v703, %v735
        %v768 = vmul.f32 %v704, %v736
        %v769 = vmul.f32 %v705, %v737
        %v770 = vmul.f32 %v706, %v738
        %v771 = vmul.f32 %v707, %v739
        %v772 = vmul.f32 %v708, %v740
        %v773 = vmul.f32 %v709, %v741
        %v774 = vmul.f32 %v710, %v742
        %v775 = vmul.f32 %v711, %v743
        %v776 = vmul.f32 %v712, %v744
        %v777 = vmul.f32 %v713, %v745
        %v778 = vmul.f32 %v714, %v746
        %v779 = vmul.f32 %v715, %v747
        %v780 = vmul.f32 %v716, %v748
        %v781 = vmul.f32 %v717, %v749
        %v782 = vmul.f32 %v718, %v750
        %v783 = vmul.f32 %v719, %v751
        %v784 = vmul.f32 %v720, %v752
        %v785 = vmul.f32 %v721, %v753
        %v786 = vmul.f32 %v722, %v754
        %v787 = vmul.f32 %v723, %v755
        %v788 = vmul.f32 %v724, %v756
        %v789 = vmul.f32 %v725, %v757
        %v790 = vmul.f32 %v726, %v758
        %v791 = vmul.f32 %v727, %v759
        %v792 = vmul.f32 %v728, %v760
        %v793 = vmul.f32 %v729, %v761
        %v794 = vmul.f32 %v730, %v762
        %v795 = vmul.f32 %v731, %v763
        %v796 = vmul.f32 %v732, %v764
        %v797 = vmul.f32 %v733, %v765
        %v798 = vmul.f32 %v766, 0.044715
        %v799 = vmul.f32 %v767, 0.044715
        %v800 = vmul.f32 %v768, 0.044715
        %v801 = vmul.f32 %v769, 0.044715
        %v802 = vmul.f32 %v770, 0.044715
        %v803 = vmul.f32 %v771, 0.044715
        %v804 = vmul.f32 %v772, 0.044715
        %v805 = vmul.f32 %v773, 0.044715
        %v806 = vmul.f32 %v774, 0.044715
        %v807 = vmul.f32 %v775, 0.044715
        %v808 = vmul.f32 %v776, 0.044715
        %v809 = vmul.f32 %v777, 0.044715
        %v810 = vmul.f32 %v778, 0.044715
        %v811 = vmul.f32 %v779, 0.044715
        %v812 = vmul.f32 %v780, 0.044715
        %v813 = vmul.f32 %v781, 0.044715
        %v814 = vmul.f32 %v782, 0.044715
        %v815 = vmul.f32 %v783, 0.044715
        %v816 = vmul.f32 %v784, 0.044715
        %v817 = vmul.f32 %v785, 0.044715
        %v818 = vmul.f32 %v786, 0.044715
        %v819 = vmul.f32 %v787, 0.044715
        %v820 = vmul.f32 %v788, 0.044715
        %v821 = vmul.f32 %v789, 0.044715
        %v822 = vmul.f32 %v790, 0.044715
        %v823 = vmul.f32 %v791, 0.044715
        %v824 = vmul.f32 %v792, 0.044715
        %v825 = vmul.f32 %v793, 0.044715
        %v826 = vmul.f32 %v794, 0.044715
        %v827 = vmul.f32 %v795, 0.044715
        %v828 = vmul.f32 %v796, 0.044715
        %v829 = vmul.f32 %v797, 0.044715
        %v830 = vadd.f32 %v702, %v798
        %v831 = vadd.f32 %v703, %v799
        %v832 = vadd.f32 %v704, %v800
        %v833 = vadd.f32 %v705, %v801
        %v834 = vadd.f32 %v706, %v802
        %v835 = vadd.f32 %v707, %v803
        %v836 = vadd.f32 %v708, %v804
        %v837 = vadd.f32 %v709, %v805
        %v838 = vadd.f32 %v710, %v806
        %v839 = vadd.f32 %v711, %v807
        %v840 = vadd.f32 %v712, %v808
        %v841 = vadd.f32 %v713, %v809
        %v842 = vadd.f32 %v714, %v810
        %v843 = vadd.f32 %v715, %v811
        %v844 = vadd.f32 %v716, %v812
        %v845 = vadd.f32 %v717, %v813
        %v846 = vadd.f32 %v718, %v814
        %v847 = vadd.f32 %v719, %v815
        %v848 = vadd.f32 %v720, %v816
        %v849 = vadd.f32 %v721, %v817
        %v850 = vadd.f32 %v722, %v818
        %v851 = vadd.f32 %v723, %v819
        %v852 = vadd.f32 %v724, %v820
        %v853 = vadd.f32 %v725, %v821
        %v854 = vadd.f32 %v726, %v822
        %v855 = vadd.f32 %v727, %v823
        %v856 = vadd.f32 %v728, %v824
        %v857 = vadd.f32 %v729, %v825
        %v858 = vadd.f32 %v730, %v826
        %v859 = vadd.f32 %v731, %v827
        %v860 = vadd.f32 %v732, %v828
        %v861 = vadd.f32 %v733, %v829
        %v862 = vmul.f32 %v830, 0.7978846
        %v863 = vmul.f32 %v831, 0.7978846
        %v864 = vmul.f32 %v832, 0.7978846
        %v865 = vmul.f32 %v833, 0.7978846
        %v866 = vmul.f32 %v834, 0.7978846
        %v867 = vmul.f32 %v835, 0.7978846
        %v868 = vmul.f32 %v836, 0.7978846
        %v869 = vmul.f32 %v837, 0.7978846
        %v870 = vmul.f32 %v838, 0.7978846
        %v871 = vmul.f32 %v839, 0.7978846
        %v872 = vmul.f32 %v840, 0.7978846
        %v873 = vmul.f32 %v841, 0.7978846
        %v874 = vmul.f32 %v842, 0.7978846
        %v875 = vmul.f32 %v843, 0.7978846
        %v876 = vmul.f32 %v844, 0.7978846
        %v877 = vmul.f32 %v845, 0.7978846
        %v878 = vmul.f32 %v846, 0.7978846
        %v879 = vmul.f32 %v847, 0.7978846
        %v880 = vmul.f32 %v848, 0.7978846
        %v881 = vmul.f32 %v849, 0.7978846
        %v882 = vmul.f32 %v850, 0.7978846
        %v883 = vmul.f32 %v851, 0.7978846
        %v884 = vmul.f32 %v852, 0.7978846
        %v885 = vmul.f32 %v853, 0.7978846
        %v886 = vmul.f32 %v854, 0.7978846
        %v887 = vmul.f32 %v855, 0.7978846
        %v888 = vmul.f32 %v856, 0.7978846
        %v889 = vmul.f32 %v857, 0.7978846
        %v890 = vmul.f32 %v858, 0.7978846
        %v891 = vmul.f32 %v859, 0.7978846
        %v892 = vmul.f32 %v860, 0.7978846
        %v893 = vmul.f32 %v861, 0.7978846
        %v894 = vtanh.pop %v862
        %v895 = vtanh.pop %v863
        %v896 = vtanh.pop %v864
        %v897 = vtanh.pop %v865
        %v898 = vtanh.pop %v866
        %v899 = vtanh.pop %v867
        %v900 = vtanh.pop %v868
        %v901 = vtanh.pop %v869
        %v902 = vtanh.pop %v870
        %v903 = vtanh.pop %v871
        %v904 = vtanh.pop %v872
        %v905 = vtanh.pop %v873
        %v906 = vtanh.pop %v874
        %v907 = vtanh.pop %v875
        %v908 = vtanh.pop %v876
        %v909 = vtanh.pop %v877
        %v910 = vtanh.pop %v878
        %v911 = vtanh.pop %v879
        %v912 = vtanh.pop %v880
        %v913 = vtanh.pop %v881
        %v914 = vtanh.pop %v882
        %v915 = vtanh.pop %v883
        %v916 = vtanh.pop %v884
        %v917 = vtanh.pop %v885
        %v918 = vtanh.pop %v886
        %v919 = vtanh.pop %v887
        %v920 = vtanh.pop %v888
        %v921 = vtanh.pop %v889
        %v922 = vtanh.pop %v890
        %v923 = vtanh.pop %v891
        %v924 = vtanh.pop %v892
        %v925 = vtanh.pop %v893
        %v926 = vadd.f32 %v894, 1.0
        %v927 = vadd.f32 %v895, 1.0
        %v928 = vadd.f32 %v896, 1.0
        %v929 = vadd.f32 %v897, 1.0
        %v930 = vadd.f32 %v898, 1.0
        %v931 = vadd.f32 %v899, 1.0
        %v932 = vadd.f32 %v900, 1.0
        %v933 = vadd.f32 %v901, 1.0
        %v934 = vadd.f32 %v902, 1.0
        %v935 = vadd.f32 %v903, 1.0
        %v936 = vadd.f32 %v904, 1.0
        %v937 = vadd.f32 %v905, 1.0
        %v938 = vadd.f32 %v906, 1.0
        %v939 = vadd.f32 %v907, 1.0
        %v940 = vadd.f32 %v908, 1.0
        %v941 = vadd.f32 %v909, 1.0
        %v942 = vadd.f32 %v910, 1.0
        %v943 = vadd.f32 %v911, 1.0
        %v944 = vadd.f32 %v912, 1.0
        %v945 = vadd.f32 %v913, 1.0
        %v946 = vadd.f32 %v914, 1.0
        %v947 = vadd.f32 %v915, 1.0
        %v948 = vadd.f32 %v916, 1.0
        %v949 = vadd.f32 %v917, 1.0
        %v950 = vadd.f32 %v918, 1.0
        %v951 = vadd.f32 %v919, 1.0
        %v952 = vadd.f32 %v920, 1.0
        %v953 = vadd.f32 %v921, 1.0
        %v954 = vadd.f32 %v922, 1.0
        %v955 = vadd.f32 %v923, 1.0
        %v956 = vadd.f32 %v924, 1.0
        %v957 = vadd.f32 %v925, 1.0
        %v958 = vmul.f32 %v926, 0.5
        %v959 = vmul.f32 %v927, 0.5
        %v960 = vmul.f32 %v928, 0.5
        %v961 = vmul.f32 %v929, 0.5
        %v962 = vmul.f32 %v930, 0.5
        %v963 = vmul.f32 %v931, 0.5
        %v964 = vmul.f32 %v932, 0.5
        %v965 = vmul.f32 %v933, 0.5
        %v966 = vmul.f32 %v934, 0.5
        %v967 = vmul.f32 %v935, 0.5
        %v968 = vmul.f32 %v936, 0.5
        %v969 = vmul.f32 %v937, 0.5
        %v970 = vmul.f32 %v938, 0.5
        %v971 = vmul.f32 %v939, 0.5
        %v972 = vmul.f32 %v940, 0.5
        %v973 = vmul.f32 %v941, 0.5
        %v974 = vmul.f32 %v942, 0.5
        %v975 = vmul.f32 %v943, 0.5
        %v976 = vmul.f32 %v944, 0.5
        %v977 = vmul.f32 %v945, 0.5
        %v978 = vmul.f32 %v946, 0.5
        %v979 = vmul.f32 %v947, 0.5
        %v980 = vmul.f32 %v948, 0.5
        %v981 = vmul.f32 %v949, 0.5
        %v982 = vmul.f32 %v950, 0.5
        %v983 = vmul.f32 %v951, 0.5
        %v984 = vmul.f32 %v952, 0.5
        %v985 = vmul.f32 %v953, 0.5
        %v986 = vmul.f32 %v954, 0.5
        %v987 = vmul.f32 %v955, 0.5
        %v988 = vmul.f32 %v956, 0.5
        %v989 = vmul.f32 %v957, 0.5
        %v990 = vmul.f32 %v702, %v958
        %v991 = vmul.f32 %v703, %v959
        %v992 = vmul.f32 %v704, %v960
        %v993 = vmul.f32 %v705, %v961
        %v994 = vmul.f32 %v706, %v962
        %v995 = vmul.f32 %v707, %v963
        %v996 = vmul.f32 %v708, %v964
        %v997 = vmul.f32 %v709, %v965
        %v998 = vmul.f32 %v710, %v966
        %v999 = vmul.f32 %v711, %v967
        %v1000 = vmul.f32 %v712, %v968
        %v1001 = vmul.f32 %v713, %v969
        %v1002 = vmul.f32 %v714, %v970
        %v1003 = vmul.f32 %v715, %v971
        %v1004 = vmul.f32 %v716, %v972
        %v1005 = vmul.f32 %v717, %v973
        %v1006 = vmul.f32 %v718, %v974
        %v1007 = vmul.f32 %v719, %v975
        %v1008 = vmul.f32 %v720, %v976
        %v1009 = vmul.f32 %v721, %v977
        %v1010 = vmul.f32 %v722, %v978
        %v1011 = vmul.f32 %v723, %v979
        %v1012 = vmul.f32 %v724, %v980
        %v1013 = vmul.f32 %v725, %v981
        %v1014 = vmul.f32 %v726, %v982
        %v1015 = vmul.f32 %v727, %v983
        %v1016 = vmul.f32 %v728, %v984
        %v1017 = vmul.f32 %v729, %v985
        %v1018 = vmul.f32 %v730, %v986
        %v1019 = vmul.f32 %v731, %v987
        %v1020 = vmul.f32 %v732, %v988
        %v1021 = vmul.f32 %v733, %v989
        %v1022 = vpack.c.bf16 %v991, %v990
        %v1023 = vpack.c.bf16 %v993, %v992
        %v1024 = vpack.c.bf16 %v995, %v994
        %v1025 = vpack.c.bf16 %v997, %v996
        %v1026 = vpack.c.bf16 %v999, %v998
        %v1027 = vpack.c.bf16 %v1001, %v1000
        %v1028 = vpack.c.bf16 %v1003, %v1002
        %v1029 = vpack.c.bf16 %v1005, %v1004
        %v1030 = vpack.c.bf16 %v1007, %v1006
        %v1031 = vpack.c.bf16 %v1009, %v1008
        %v1032 = vpack.c.bf16 %v1011, %v1010
        %v1033 = vpack.c.bf16 %v1013, %v1012
        %v1034 = vpack.c.bf16 %v1015, %v1014
        %v1035 = vpack.c.bf16 %v1017, %v1016
        %v1036 = vpack.c.bf16 %v1019, %v1018
        %v1037 = vpack.c.bf16 %v1021, %v1020
        %v1054 = vunpack.c.l.b16 %v1022
        %v1055 = vunpack.c.h.b16 %v1022
        %v1056 = vunpack.c.l.b16 %v1023
        %v1057 = vunpack.c.h.b16 %v1023
        %v1058 = vunpack.c.l.b16 %v1024
        %v1059 = vunpack.c.h.b16 %v1024
        %v1060 = vunpack.c.l.b16 %v1025
        %v1061 = vunpack.c.h.b16 %v1025
        %v1062 = vunpack.c.l.b16 %v1026
        %v1063 = vunpack.c.h.b16 %v1026
        %v1064 = vunpack.c.l.b16 %v1027
        %v1065 = vunpack.c.h.b16 %v1027
        %v1066 = vunpack.c.l.b16 %v1028
        %v1067 = vunpack.c.h.b16 %v1028
        %v1068 = vunpack.c.l.b16 %v1029
        %v1069 = vunpack.c.h.b16 %v1029
        %v1070 = vunpack.c.l.b16 %v1030
        %v1071 = vunpack.c.h.b16 %v1030
        %v1072 = vunpack.c.l.b16 %v1031
        %v1073 = vunpack.c.h.b16 %v1031
        %v1074 = vunpack.c.l.b16 %v1032
        %v1075 = vunpack.c.h.b16 %v1032
        %v1076 = vunpack.c.l.b16 %v1033
        %v1077 = vunpack.c.h.b16 %v1033
        %v1078 = vunpack.c.l.b16 %v1034
        %v1079 = vunpack.c.h.b16 %v1034
        %v1080 = vunpack.c.l.b16 %v1035
        %v1081 = vunpack.c.h.b16 %v1035
        %v1082 = vunpack.c.l.b16 %v1036
        %v1083 = vunpack.c.h.b16 %v1036
        %v1084 = vunpack.c.l.b16 %v1037
        %v1085 = vunpack.c.h.b16 %v1037
        %v1086 = vpack.c.b16 %v1054, %v1054
        %v1087 = vpack.c.b16 %v1055, %v1055
        %v1088 = vpack.c.b16 %v1056, %v1056
        %v1089 = vpack.c.b16 %v1057, %v1057
        %v1090 = vpack.c.b16 %v1058, %v1058
        %v1091 = vpack.c.b16 %v1059, %v1059
        %v1092 = vpack.c.b16 %v1060, %v1060
        %v1093 = vpack.c.b16 %v1061, %v1061
        %v1094 = vpack.c.b16 %v1062, %v1062
        %v1095 = vpack.c.b16 %v1063, %v1063
        %v1096 = vpack.c.b16 %v1064, %v1064
        %v1097 = vpack.c.b16 %v1065, %v1065
        %v1098 = vpack.c.b16 %v1066, %v1066
        %v1099 = vpack.c.b16 %v1067, %v1067
        %v1100 = vpack.c.b16 %v1068, %v1068
        %v1101 = vpack.c.b16 %v1069, %v1069
        %v1102 = vpack.c.b16 %v1070, %v1070
        %v1103 = vpack.c.b16 %v1071, %v1071
        %v1104 = vpack.c.b16 %v1072, %v1072
        %v1105 = vpack.c.b16 %v1073, %v1073
        %v1106 = vpack.c.b16 %v1074, %v1074
        %v1107 = vpack.c.b16 %v1075, %v1075
        %v1108 = vpack.c.b16 %v1076, %v1076
        %v1109 = vpack.c.b16 %v1077, %v1077
        %v1110 = vpack.c.b16 %v1078, %v1078
        %v1111 = vpack.c.b16 %v1079, %v1079
        %v1112 = vpack.c.b16 %v1080, %v1080
        %v1113 = vpack.c.b16 %v1081, %v1081
        %v1114 = vpack.c.b16 %v1082, %v1082
        %v1115 = vpack.c.b16 %v1083, %v1083
        %v1116 = vpack.c.b16 %v1084, %v1084
        %v1117 = vpack.c.b16 %v1085, %v1085
        %vm1150 = vcmask 519168
        %1151 = vst.msk [vmem:[%s216] sm:$0xf] %vm1150, %v1086
        %1152 = vst.msk [vmem:[%s216 + $0x4] sm:$0xf] %vm1150, %v1087
        %1153 = vst.msk [vmem:[%s216 + $0x8] sm:$0xf] %vm1150, %v1088
        %1154 = vst.msk [vmem:[%s216 + $0xc] sm:$0xf] %vm1150, %v1089
        %1155 = vst.msk [vmem:[%s216 + $0x10] sm:$0xf] %vm1150, %v1090
        %1156 = vst.msk [vmem:[%s216 + $0x14] sm:$0xf] %vm1150, %v1091
        %1157 = vst.msk [vmem:[%s216 + $0x18] sm:$0xf] %vm1150, %v1092
        %1158 = vst.msk [vmem:[%s216 + $0x1c] sm:$0xf] %vm1150, %v1093
        %1159 = vst.msk [vmem:[%s216 + $0x20] sm:$0xf] %vm1150, %v1094
        %1160 = vst.msk [vmem:[%s216 + $0x24] sm:$0xf] %vm1150, %v1095
        %1161 = vst.msk [vmem:[%s216 + $0x28] sm:$0xf] %vm1150, %v1096
        %1162 = vst.msk [vmem:[%s216 + $0x2c] sm:$0xf] %vm1150, %v1097
        %1163 = vst.msk [vmem:[%s216 + $0x30] sm:$0xf] %vm1150, %v1098
        %1164 = vst.msk [vmem:[%s216 + $0x34] sm:$0xf] %vm1150, %v1099
        %1165 = vst.msk [vmem:[%s216 + $0x38] sm:$0xf] %vm1150, %v1100
        %1166 = vst.msk [vmem:[%s216 + $0x3c] sm:$0xf] %vm1150, %v1101
        %1167 = vst.msk [vmem:[%s216 + $0x40] sm:$0xf] %vm1150, %v1102
        %1168 = vst.msk [vmem:[%s216 + $0x44] sm:$0xf] %vm1150, %v1103
        %1169 = vst.msk [vmem:[%s216 + $0x48] sm:$0xf] %vm1150, %v1104
        %1170 = vst.msk [vmem:[%s216 + $0x4c] sm:$0xf] %vm1150, %v1105
        %1171 = vst.msk [vmem:[%s216 + $0x50] sm:$0xf] %vm1150, %v1106
        %1172 = vst.msk [vmem:[%s216 + $0x54] sm:$0xf] %vm1150, %v1107
        %1173 = vst.msk [vmem:[%s216 + $0x58] sm:$0xf] %vm1150, %v1108
        %1174 = vst.msk [vmem:[%s216 + $0x5c] sm:$0xf] %vm1150, %v1109
        %1175 = vst.msk [vmem:[%s216 + $0x60] sm:$0xf] %vm1150, %v1110
        %1176 = vst.msk [vmem:[%s216 + $0x64] sm:$0xf] %vm1150, %v1111
        %1177 = vst.msk [vmem:[%s216 + $0x68] sm:$0xf] %vm1150, %v1112
        %1178 = vst.msk [vmem:[%s216 + $0x6c] sm:$0xf] %vm1150, %v1113
        %1179 = vst.msk [vmem:[%s216 + $0x70] sm:$0xf] %vm1150, %v1114
        %1180 = vst.msk [vmem:[%s216 + $0x74] sm:$0xf] %vm1150, %v1115
        %1181 = vst.msk [vmem:[%s216 + $0x78] sm:$0xf] %vm1150, %v1116
        %1182 = vst.msk [vmem:[%s216 + $0x7c] sm:$0xf] %vm1150, %v1117
      $region36: #{_mm_call.1} parent=27 // pred_fallthru
        _
      %s1183 = smul.u32 32, %s18
      %p1184 = scmp.lt.s32.totalorder %s1183, 63
      %s1185 = scalar_select %p1184, %s1183, 63
      %p1186 = scmp.lt.s32.totalorder %s19, 0
      %s1187 = scalar_select %p1186, %s19, 0
      %s1188 = sadd.s32 %s1187, %s1185
      %s1189 = smul.addr %s1188, 4
      %s1190 = scalar_lea.vmem %s2, %s1189
      // Predicated region
      $region37: #{_mm_call.1} parent=27 // pred_check
        %p1191 = pneg %p108
      $region38: #{_mm_call.1} parent=27 // pred_check_branch
        %1193 = sbr.rel (%p1191) target = $region40
      $region39: #{_mm_call.1} parent=27 // pred_region
        %s1194 = smul.u32 32, %s18
      $region40: #{_mm_call.1} parent=27 // pred_fallthru
        _
    $region28: #{_mm_call.1} parent=5 // pred_fallthru
      _
    %p1195 = scmp.le.s32.totalorder 2, %s8
    // Predicated region
    $region41: #{_mm_call.1} parent=5 // pred_check
      %p1196 = pneg %p1195
    $region42: #{_mm_call.1} parent=5 // pred_check_branch
      %1198 = sbr.rel (%p1196) target = $region44
    $region43: #{_mm_call.1} parent=5 // pred_region
      %s1199 = ssub.s32 %s8, 2
      // Predicated region
      $region45: #{_mm_call.1} parent=43 // pred_check
        %p1200 = pneg %p114
      $region46: #{_mm_call.1} parent=43 // pred_check_branch
        %1202 = sbr.rel (%p1200) target = $region48
      $region47: #{_mm_call.1} parent=43 // pred_region
        %s1203 = smul.u32 32, %s21
        %p1204 = scmp.lt.s32.totalorder %s1203, 63
        %s1205 = scalar_select %p1204, %s1203, 63
        %p1206 = scmp.lt.s32.totalorder %s22, 0
        %s1207 = scalar_select %p1206, %s22, 0
        %s1208 = sadd.s32 %s1207, %s1205
        %s1209 = smul.addr %s1208, 4
        %s1210 = scalar_lea.vmem %s2, %s1209
      $region48: #{_mm_call.1} parent=43 // pred_fallthru
        _
    $region44: #{_mm_call.1} parent=5 // pred_fallthru
      _
  $region6: #{_mm_call.1} parent=0 // loop_footer
    %s12 = sadd.s32 1, %s8
  $region7: #{_mm_call.1} parent=0 // loop_footer_branch
    %7 = sbr.rel target = $region3
  $region8: #{_mm_call.1} parent=0 // loop_exit
    _

</llo_original>
